<compile_context>
chip_gen: v7x
topology: tpu7x:2x2x1
jax: 0.10.0
libtpu: 0.0.40
codegen_flags: <defaults>
</compile_context>

<pallas_src>
import jax
import jax.numpy as jnp
import numpy as np
from jax.experimental import pallas as pl
from jax.experimental.pallas import tpu as pltpu

# ----------------------------- configuration -----------------------------
B = 2            # batch
WINDOW = 15      # time steps (floor(WINDOW/15)==1 so fc1 input size matches)
SPLIT = 5        # split_horizon
NLEV = WINDOW // SPLIT
CIN = 144        # input channels (hardcoded in the PyTorch module)
NCONV = 32       # n_conv
NCW = 32         # n_codewords
KSIZE = 5        # input_conv kernel size
PAD = 2          # input_conv padding
POOL2 = 15       # hardcoded avg_pool kernel in apply_temporal_bof_input (ref only)
HID = 512
NOUT = 3
NOUT_PAD = 128   # lane-dense output width (sliced to NOUT in the wrapper)
FEAT = NCW * NLEV + NCW        # fc1 input features in the PyTorch module
BIAS_LANE = KSIZE * CIN        # 720: constant-1 lane carrying the conv bias
KPAD = 768                     # im2col contraction, padded to a multiple of 128


# ------------------------------ Pallas kernel -----------------------------
def mlbof_kernel(x_ref, wc_ref, wb_ref, w1_ref, w2_ref, bias_ref, scal_ref,
                 out_ref):
    # scalars (SMEM): a, c, n1, n2
    a = scal_ref[0]
    c = scal_ref[1]
    n1 = scal_ref[2]
    n2 = scal_ref[3]

    bias = bias_ref[...]                            # (3, HID) f32 packed biases

    # ---- input_conv (5-tap Conv1d) as a single im2col matmul + tanh ----
    # x_ref: (B*T, KPAD) bf16; column BIAS_LANE is 1.0 and the matching weight
    # row carries the conv bias, so the bias add is folded into the matmul.
    conv = jnp.dot(x_ref[...], wc_ref[...],
                   preferred_element_type=jnp.float32)      # (B*T, NCONV) f32
    h = jnp.tanh(conv)

    # ---- apply_temporal_bof: 1x1 conv + scaled tanh + codeword normalize ----
    s = jnp.dot(h.astype(jnp.bfloat16), wb_ref[...],
                preferred_element_type=jnp.float32)         # (B*T, NCW)
    s = s + bias[0:1, :NCW]
    s = jnp.tanh(a * s + c)
    s = (s + 1.0) * 0.5
    denom = jnp.sum(s, axis=-1, keepdims=True)              # (B*T, 1)
    s = s * (n1 * pl.reciprocal(denom, approx=True))        # EUP reciprocal
    s = s.reshape(B, WINDOW, NCW)

    # ---- non-overlapping avg_pool over SPLIT, * n2; level-major flatten ----
    pooled = [jnp.mean(s[:, l * SPLIT:(l + 1) * SPLIT, :], axis=1)
              for l in range(NLEV)]
    hist = jnp.concatenate(pooled, axis=-1) * n2            # (B, NLEV*NCW)

    # NOTE: the apply_temporal_bof_input branch is multiplied by 0 in the
    # PyTorch forward; it (and its fc1 weight columns) contribute nothing and
    # are dropped here entirely.

    # ---- fc1 (one fused matmul over all levels; weights pre-permuted) ----
    h1 = jnp.dot(hist.astype(jnp.bfloat16), w1_ref[...],
                 preferred_element_type=jnp.float32) + bias[1:2, :]
    h1 = jnp.maximum(h1, 0.0)                                # ReLU
    # TODO(synk): F.dropout(p=0.5) omitted — eval-mode (deterministic) forward.

    # ---- fc2 into a lane-dense (B, 128) output (cols >= NOUT are zero) ----
    out_ref[...] = jnp.dot(h1.astype(jnp.bfloat16), w2_ref[...],
                           preferred_element_type=jnp.float32) \
        + bias[2:3, :NOUT_PAD]


# --------------------- one-time parameter preparation ----------------------
def prepare_params(P):
    """Re-layout / fuse weights once (hoisted out of the per-call path)."""
    # input_conv: (NCONV, CIN, K) torch layout -> im2col weight (K*CIN, NCONV),
    # with the conv bias folded in as an extra row matched to the ones-lane.
    w_conv = jnp.transpose(P['w_in_pt'], (2, 1, 0)).reshape(KSIZE * CIN, NCONV)
    w_conv = jnp.concatenate(
        [w_conv, P['b_in'][None, :],
         jnp.zeros((KPAD - BIAS_LANE - 1, NCONV), jnp.float32)], axis=0)

    w_bof = P['w_bof_pt'][:, :, 0].T                          # (NCONV, NCW)

    # fc1: PyTorch flatten order is codeword-major (cw*NLEV + lev); the kernel
    # builds hist level-major (lev*NCW + cw), so permute the weight rows here.
    w1_t = P['w_fc1'].T                                       # (FEAT, HID)
    w1 = (w1_t[:NCW * NLEV].reshape(NCW, NLEV, HID)
          .transpose(1, 0, 2).reshape(NLEV * NCW, HID))
    # rows for the zero-multiplied hist2 features are dropped (dead branch).

    w2 = jnp.zeros((HID, NOUT_PAD), jnp.float32).at[:, :NOUT].set(P['w_fc2'].T)

    bias = jnp.zeros((3, HID), jnp.float32)
    bias = bias.at[0, :NCW].set(P['b_bof'])
    bias = bias.at[1, :].set(P['b_fc1'])
    bias = bias.at[2, :NOUT].set(P['b_fc2'])

    scal = jnp.array([P['a'], P['c'], P['n1'], P['n2']], jnp.float32)

    return dict(w_conv=w_conv.astype(jnp.bfloat16),
                w_bof=w_bof.astype(jnp.bfloat16),
                w1=w1.astype(jnp.bfloat16),
                w2=w2.astype(jnp.bfloat16),
                bias=bias, scal=scal)


# ------------------------------ wrapper (glue) -----------------------------
def _build_im2col(x):
    # x: (B, WINDOW, CIN) f32 -> (B*WINDOW, KPAD) bf16, with a 1.0 bias lane.
    xp = jnp.pad(x, ((0, 0), (PAD, PAD), (0, 0)))
    cols = [xp[:, k:k + WINDOW, :] for k in range(KSIZE)]
    cols.append(jnp.ones((B, WINDOW, 1), jnp.float32))
    cols.append(jnp.zeros((B, WINDOW, KPAD - BIAS_LANE - 1), jnp.float32))
    return jnp.concatenate(cols, axis=-1).reshape(B * WINDOW, KPAD) \
        .astype(jnp.bfloat16)


@jax.jit
def mlbof_forward(x, prep):
    xi = _build_im2col(x)
    vspec = pl.BlockSpec(memory_space=pltpu.MemorySpace.VMEM)
    sspec = pl.BlockSpec(memory_space=pltpu.MemorySpace.SMEM)
    out = pl.pallas_call(
        mlbof_kernel,
        out_shape=jax.ShapeDtypeStruct((B, NOUT_PAD), jnp.float32),
        in_specs=[vspec] * 6 + [sspec],
        out_specs=vspec,
    )(xi, prep['w_conv'], prep['w_bof'], prep['w1'], prep['w2'],
      prep['bias'], prep['scal'])
    return out[:, :NOUT]


# ----------------------- deterministic parameter init ----------------------
def init_params(key):
    ks = jax.random.split(key, 10)

    def w(k, shape, scale=0.05):
        return scale * jax.random.normal(k, shape, jnp.float32)

    return dict(
        w_in_pt=w(ks[0], (NCONV, CIN, KSIZE)),   # input_conv weight (torch layout)
        b_in=w(ks[1], (NCONV,)),
        w_bof_pt=w(ks[2], (NCW, NCONV, 1)),      # bof_conv weight
        b_bof=w(ks[3], (NCW,)),
        w_b2_pt=w(ks[4], (NCW, CIN, 1)),         # bof_conv2 (dead branch, ref only)
        b_b2=w(ks[5], (NCW,)),
        w_fc1=w(ks[6], (HID, FEAT)),
        b_fc1=w(ks[7], (HID,)),
        w_fc2=w(ks[8], (NOUT, HID)),
        b_fc2=w(ks[9], (NOUT,)),
        a=1.0, c=0.0, a2=1.0, c2=0.0,
        n1=float(NCW), n2=float(SPLIT), n12=float(NCW),
        # bn_cnv and n22 exist in __init__ but are unused in forward.
    )


# --------------------- pure-JAX reference (PyTorch order) ------------------
def torch_like_ref(x, P):
    pe = jax.lax.Precision.HIGHEST
    xt = jnp.transpose(x, (0, 2, 1))                                  # (B, CIN, T)

    # apply_temporal_bof_input (kept in the reference; multiplied by 0 below)
    h2 = jnp.einsum('oc,bct->bot', P['w_b2_pt'][:, :, 0], xt,
                    precision=pe) + P['b_b2'][None, :, None]
    h2 = jnp.tanh(P['a2'] * h2 + P['c2'])
    h2 = (h2 + 1.0) / 2.0
    h2 = h2 / jnp.sum(h2, axis=1, keepdims=True) * P['n12']
    h2 = jnp.mean(h2[:, :, :POOL2], axis=2, keepdims=True) * float(POOL2)
    hist2 = h2.reshape(B, -1) * 0.0

    # input_conv + tanh
    xpad = jnp.pad(xt, ((0, 0), (0, 0), (PAD, PAD)))
    y = jnp.zeros((B, NCONV, WINDOW), jnp.float32)
    for k in range(KSIZE):
        y = y + jnp.einsum('oc,bct->bot', P['w_in_pt'][:, :, k],
                           xpad[:, :, k:k + WINDOW], precision=pe)
    y = jnp.tanh(y + P['b_in'][None, :, None])

    # apply_temporal_bof
    s = jnp.einsum('oc,bct->bot', P['w_bof_pt'][:, :, 0], y,
                   precision=pe) + P['b_bof'][None, :, None]
    s = jnp.tanh(P['a'] * s + P['c'])
    s = (s + 1.0) / 2.0
    s = s / jnp.sum(s, axis=1, keepdims=True) * P['n1']
    s = s.reshape(B, NCW, NLEV, SPLIT).mean(axis=3) * P['n2']
    hist1 = s.reshape(B, -1)

    feat = jnp.concatenate([hist1, hist2], axis=1)
    h = jax.nn.relu(jnp.dot(feat, P['w_fc1'].T, precision=pe) + P['b_fc1'])
    return jnp.dot(h, P['w_fc2'].T, precision=pe) + P['b_fc2']


# ----------------------------------- main ----------------------------------
if __name__ == "__main__":
    key = jax.random.PRNGKey(0)
    kx, kp = jax.random.split(key)
    x = jax.random.normal(kx, (B, WINDOW, CIN), jnp.float32)
    params = init_params(kp)
    prep = prepare_params(params)        # one-time weight re-layout / fusion

    out = jax.block_until_ready(mlbof_forward(x, prep))
    assert out.shape == (B, NOUT), out.shape

    ref = jax.block_until_ready(torch_like_ref(x, params))
    # bf16 matmul inputs with f32 accumulation (per perf review) -> slightly
    # looser tolerance than the pure-f32 variant.
    np.testing.assert_allclose(np.asarray(out), np.asarray(ref),
                               rtol=2e-2, atol=2e-2)
    print("KERNEL_OK")
</pallas_src>

<mosaic_0001>
module attributes {stable_mosaic.version = 11 : i64} {
  func.func @mlbof_kernel(%arg0: memref<30x768xbf16, #tpu.memory_space<vmem>>, %arg1: memref<768x32xbf16, #tpu.memory_space<vmem>>, %arg2: memref<32x32xbf16, #tpu.memory_space<vmem>>, %arg3: memref<96x512xbf16, #tpu.memory_space<vmem>>, %arg4: memref<512x128xbf16, #tpu.memory_space<vmem>>, %arg5: memref<3x512xf32, #tpu.memory_space<vmem>>, %arg6: memref<4xf32, #tpu.memory_space<smem>>, %arg7: memref<2x128xf32, #tpu.memory_space<vmem>>) attributes {dimension_semantics = [], scalar_prefetch = 0 : i64, scratch_operands = 0 : i64, tpu.core_type = #tpu.core_type<tc>} {
    %c0 = arith.constant 0 : index
    %0 = memref.load %arg6[%c0] : memref<4xf32, #tpu.memory_space<smem>>
    %c1 = arith.constant 1 : index
    %1 = memref.load %arg6[%c1] : memref<4xf32, #tpu.memory_space<smem>>
    %c2 = arith.constant 2 : index
    %2 = memref.load %arg6[%c2] : memref<4xf32, #tpu.memory_space<smem>>
    %c3 = arith.constant 3 : index
    %3 = memref.load %arg6[%c3] : memref<4xf32, #tpu.memory_space<smem>>
    %c0_0 = arith.constant 0 : index
    %c0_1 = arith.constant 0 : index
    %4 = vector.load %arg5[%c0_0, %c0_1] : memref<3x512xf32, #tpu.memory_space<vmem>>, vector<3x512xf32>
    %c0_2 = arith.constant 0 : index
    %c0_3 = arith.constant 0 : index
    %5 = vector.load %arg0[%c0_2, %c0_3] : memref<30x768xbf16, #tpu.memory_space<vmem>>, vector<30x768xbf16>
    %c0_4 = arith.constant 0 : index
    %c0_5 = arith.constant 0 : index
    %6 = vector.load %arg1[%c0_4, %c0_5] : memref<768x32xbf16, #tpu.memory_space<vmem>>, vector<768x32xbf16>
    %cst = arith.constant dense<0.000000e+00> : vector<30x32xf32>
    %7 = tpu.matmul %5, %6, %cst {dimension_numbers = #tpu.dot_dimension_numbers<[1], [0], [0], [1], [0, 0, 1, 1], [], []>} : vector<30x768xbf16>, vector<768x32xbf16>, vector<30x32xf32> -> vector<30x32xf32>
    %8 = math.tanh %7 : vector<30x32xf32>
    %9 = arith.truncf %8 : vector<30x32xf32> to vector<30x32xbf16>
    %c0_6 = arith.constant 0 : index
    %c0_7 = arith.constant 0 : index
    %10 = vector.load %arg2[%c0_6, %c0_7] : memref<32x32xbf16, #tpu.memory_space<vmem>>, vector<32x32xbf16>
    %cst_8 = arith.constant dense<0.000000e+00> : vector<30x32xf32>
    %11 = tpu.matmul %9, %10, %cst_8 {dimension_numbers = #tpu.dot_dimension_numbers<[1], [0], [0], [1], [0, 0, 1, 1], [], []>} : vector<30x32xbf16>, vector<32x32xbf16>, vector<30x32xf32> -> vector<30x32xf32>
    %12 = vector.extract_strided_slice %4 {offsets = [0, 0], sizes = [1, 32], strides = [1, 1]} : vector<3x512xf32> to vector<1x32xf32>
    %13 = vector.broadcast %12 : vector<1x32xf32> to vector<30x32xf32>
    %14 = arith.addf %11, %13 : vector<30x32xf32>
    %15 = vector.broadcast %0 : f32 to vector<30x32xf32>
    %16 = arith.mulf %15, %14 : vector<30x32xf32>
    %17 = vector.broadcast %1 : f32 to vector<30x32xf32>
    %18 = arith.addf %16, %17 : vector<30x32xf32>
    %19 = math.tanh %18 : vector<30x32xf32>
    %cst_9 = arith.constant 1.000000e+00 : f32
    %20 = vector.broadcast %cst_9 : f32 to vector<30x32xf32>
    %21 = arith.addf %19, %20 : vector<30x32xf32>
    %cst_10 = arith.constant 5.000000e-01 : f32
    %22 = vector.broadcast %cst_10 : f32 to vector<30x32xf32>
    %23 = arith.mulf %21, %22 : vector<30x32xf32>
    %cst_11 = arith.constant dense<0.000000e+00> : vector<30xf32>
    %24 = vector.multi_reduction <add>, %23, %cst_11 [1] : vector<30x32xf32> to vector<30xf32>
    %25 = vector.shape_cast %24 : vector<30xf32> to vector<30x1xf32>
    %26 = tpu.reciprocal %25 {approx = true} : vector<30x1xf32> -> vector<30x1xf32>
    %27 = vector.broadcast %2 : f32 to vector<30x1xf32>
    %28 = arith.mulf %27, %26 : vector<30x1xf32>
    %29 = vector.broadcast %28 : vector<30x1xf32> to vector<30x32xf32>
    %30 = arith.mulf %23, %29 : vector<30x32xf32>
    %31 = vector.shape_cast %30 : vector<30x32xf32> to vector<2x15x32xf32>
    %32 = vector.extract_strided_slice %31 {offsets = [0, 0, 0], sizes = [2, 5, 32], strides = [1, 1, 1]} : vector<2x15x32xf32> to vector<2x5x32xf32>
    %cst_12 = arith.constant dense<0.000000e+00> : vector<2x32xf32>
    %33 = vector.multi_reduction <add>, %32, %cst_12 [1] : vector<2x5x32xf32> to vector<2x32xf32>
    %cst_13 = arith.constant 5.000000e+00 : f32
    %34 = vector.broadcast %cst_13 : f32 to vector<2x32xf32>
    %35 = arith.divf %33, %34 : vector<2x32xf32>
    %36 = vector.extract_strided_slice %31 {offsets = [0, 5, 0], sizes = [2, 5, 32], strides = [1, 1, 1]} : vector<2x15x32xf32> to vector<2x5x32xf32>
    %cst_14 = arith.constant dense<0.000000e+00> : vector<2x32xf32>
    %37 = vector.multi_reduction <add>, %36, %cst_14 [1] : vector<2x5x32xf32> to vector<2x32xf32>
    %cst_15 = arith.constant 5.000000e+00 : f32
    %38 = vector.broadcast %cst_15 : f32 to vector<2x32xf32>
    %39 = arith.divf %37, %38 : vector<2x32xf32>
    %40 = vector.extract_strided_slice %31 {offsets = [0, 10, 0], sizes = [2, 5, 32], strides = [1, 1, 1]} : vector<2x15x32xf32> to vector<2x5x32xf32>
    %cst_16 = arith.constant dense<0.000000e+00> : vector<2x32xf32>
    %41 = vector.multi_reduction <add>, %40, %cst_16 [1] : vector<2x5x32xf32> to vector<2x32xf32>
    %cst_17 = arith.constant 5.000000e+00 : f32
    %42 = vector.broadcast %cst_17 : f32 to vector<2x32xf32>
    %43 = arith.divf %41, %42 : vector<2x32xf32>
    %44 = tpu.concatenate %35, %39, %43 in 1 : vector<2x32xf32>, vector<2x32xf32>, vector<2x32xf32> -> vector<2x96xf32>
    %45 = vector.broadcast %3 : f32 to vector<2x96xf32>
    %46 = arith.mulf %44, %45 : vector<2x96xf32>
    %47 = arith.truncf %46 : vector<2x96xf32> to vector<2x96xbf16>
    %c0_18 = arith.constant 0 : index
    %c0_19 = arith.constant 0 : index
    %48 = vector.load %arg3[%c0_18, %c0_19] : memref<96x512xbf16, #tpu.memory_space<vmem>>, vector<96x512xbf16>
    %cst_20 = arith.constant dense<0.000000e+00> : vector<2x512xf32>
    %49 = tpu.matmul %47, %48, %cst_20 {dimension_numbers = #tpu.dot_dimension_numbers<[1], [0], [0], [1], [0, 0, 1, 1], [], []>} : vector<2x96xbf16>, vector<96x512xbf16>, vector<2x512xf32> -> vector<2x512xf32>
    %50 = vector.extract_strided_slice %4 {offsets = [1, 0], sizes = [1, 512], strides = [1, 1]} : vector<3x512xf32> to vector<1x512xf32>
    %51 = vector.broadcast %50 : vector<1x512xf32> to vector<2x512xf32>
    %52 = arith.addf %49, %51 : vector<2x512xf32>
    %cst_21 = arith.constant 0.000000e+00 : f32
    %53 = vector.broadcast %cst_21 : f32 to vector<2x512xf32>
    %54 = arith.maximumf %52, %53 : vector<2x512xf32>
    %55 = arith.truncf %54 : vector<2x512xf32> to vector<2x512xbf16>
    %c0_22 = arith.constant 0 : index
    %c0_23 = arith.constant 0 : index
    %56 = vector.load %arg4[%c0_22, %c0_23] : memref<512x128xbf16, #tpu.memory_space<vmem>>, vector<512x128xbf16>
    %cst_24 = arith.constant dense<0.000000e+00> : vector<2x128xf32>
    %57 = tpu.matmul %55, %56, %cst_24 {dimension_numbers = #tpu.dot_dimension_numbers<[1], [0], [0], [1], [0, 0, 1, 1], [], []>} : vector<2x512xbf16>, vector<512x128xbf16>, vector<2x128xf32> -> vector<2x128xf32>
    %58 = vector.extract_strided_slice %4 {offsets = [2, 0], sizes = [1, 128], strides = [1, 1]} : vector<3x512xf32> to vector<1x128xf32>
    %59 = vector.broadcast %58 : vector<1x128xf32> to vector<2x128xf32>
    %60 = arith.addf %57, %59 : vector<2x128xf32>
    %c0_25 = arith.constant 0 : index
    %c0_26 = arith.constant 0 : index
    %61 = vector.load %arg7[%c0_25, %c0_26] : memref<2x128xf32, #tpu.memory_space<vmem>>, vector<2x128xf32>
    tpu.vector_store %arg7[%c0_25, %c0_26], %60 {strides = array<i32>} : memref<2x128xf32, #tpu.memory_space<vmem>>, vector<2x128xf32>,
    return
  }
}

</mosaic_0001>

<llo_original>
// kernel: mlbof_forward.1
$region0: #{mlbof_forward.1}
  #allocation0 [shape = 'u32[]', space=smem, size = 0x4, offset = 0x4, fixed_abs, tag = 'smem constant byte address 0x4 - core index']
  #allocation1 [shape = 'u32[144,128]{1,0:T(1,128)}', space=vmem, size = 0x12000, scoped, tag = 'internal scratch']
  %s0 = inlined_call_operand.vmem [shape: bf16[30,768], index: 0, kind: input, shape index: {}]
  %s1 = inlined_call_operand.vmem [shape: bf16[768,32], index: 1, kind: input, shape index: {}]
  %s2 = inlined_call_operand.vmem [shape: bf16[32,32], index: 2, kind: input, shape index: {}]
  %s3 = inlined_call_operand.vmem [shape: bf16[96,512], index: 3, kind: input, shape index: {}]
  %s4 = inlined_call_operand.vmem [shape: bf16[512,128], index: 4, kind: input, shape index: {}]
  %s5 = inlined_call_operand.vmem [shape: f32[3,512], index: 5, kind: input, shape index: {}]
  %s6 = inlined_call_operand.vmem [shape: f32[4], index: 6, kind: input, shape index: {}]
  %s7 = inlined_call_operand.hbm [shape: f32[2,128], index: 7, kind: output, shape index: {}]
  %s8 = sld [smem:[#allocation0]]
  $region42: #{mlbof_forward.1} parent=0
    _
  %s10 = ssub.s32 1, %s8
  %s11 = scalar_select 0, %s10, %s8
  $region1: #{mlbof_forward.1} parent=0
    #allocation2 [shape = 'u8[512]{0}', space=smem, size = 0x200, scoped, tag = 'input window, operand 6, single buffered']
    #allocation3 [shape = 's32[1]{0}', space=sflag, size = 0x4, scoped, tag = 'scoped memory for mlbof_forward.1']
    #allocation4 [shape = 's32[1]{0}', space=sflag, size = 0x4, scoped, tag = 'scoped memory for mlbof_forward.1']
    #allocation5 [shape = 'u8[1024]{0}', space=vmem, size = 0x400, scoped, tag = 'output window, operand 0, single buffered']
    %12 = vsyncpa [#allocation4], 0
    %13 = vsyncpa [#allocation3], 0
    // Predicated region
    $region2: #{mlbof_forward.1} parent=1 // pred_check
      _
    $region3: #{mlbof_forward.1} parent=1 // pred_check_branch
      %15 = sbr.rel (0) target = $region5
    $region4: #{mlbof_forward.1} parent=1 // pred_region
      _
    $region5: #{mlbof_forward.1} parent=1 // pred_fallthru
      _
    // Predicated region
    $region6: #{mlbof_forward.1} parent=1 // pred_check
      _
    $region7: #{mlbof_forward.1} parent=1 // pred_check_branch
      %17 = sbr.rel (0) target = $region9
    $region8: #{mlbof_forward.1} parent=1 // pred_region
      _
    $region9: #{mlbof_forward.1} parent=1 // pred_fallthru
      _
    // Predicated region
    $region10: #{mlbof_forward.1} parent=1 // pred_check
      _
    $region11: #{mlbof_forward.1} parent=1 // pred_check_branch
      %19 = sbr.rel (0) target = $region13
    $region12: #{mlbof_forward.1} parent=1 // pred_region
      _
    $region13: #{mlbof_forward.1} parent=1 // pred_fallthru
      _
    // Predicated region
    $region14: #{mlbof_forward.1} parent=1 // pred_check
      _
    $region15: #{mlbof_forward.1} parent=1 // pred_check_branch
      %21 = sbr.rel (0) target = $region17
    $region16: #{mlbof_forward.1} parent=1 // pred_region
      _
    $region17: #{mlbof_forward.1} parent=1 // pred_fallthru
      _
    // Predicated region
    $region18: #{mlbof_forward.1} parent=1 // pred_check
      _
    $region19: #{mlbof_forward.1} parent=1 // pred_check_branch
      %23 = sbr.rel (0) target = $region21
    $region20: #{mlbof_forward.1} parent=1 // pred_region
      _
    $region21: #{mlbof_forward.1} parent=1 // pred_fallthru
      _
    // Predicated region
    $region22: #{mlbof_forward.1} parent=1 // pred_check
      _
    $region23: #{mlbof_forward.1} parent=1 // pred_check_branch
      %25 = sbr.rel (0) target = $region25
    $region24: #{mlbof_forward.1} parent=1 // pred_region
      _
    $region25: #{mlbof_forward.1} parent=1 // pred_fallthru
      _
    // Predicated region
    $region26: #{mlbof_forward.1} parent=1 // pred_check
      _
    $region27: #{mlbof_forward.1} parent=1 // pred_check_branch
      %27 = sbr.rel (0) target = $region29
    $region28: #{mlbof_forward.1} parent=1 // pred_region
      %s29 = ssub.s32 16, 16
      %30 = vsyncadd [#allocation4], %s29
      %s32 = sshll.u32 %s6, 4
      %s33 = int_to_ptr.vmem [resolvable:$true] %s32
      %35 = dma.vmem_to_smem %s33, 16, [#allocation2], [#allocation4]
    $region29: #{mlbof_forward.1} parent=1 // pred_fallthru
      _
    // Predicated region
    $region30: #{mlbof_forward.1} parent=1 // pred_check
      _
    $region31: #{mlbof_forward.1} parent=1 // pred_check_branch
      %37 = sbr.rel (0) target = $region33
    $region32: #{mlbof_forward.1} parent=1 // pred_region
      %38 = dma.done [#allocation4], 16
    $region33: #{mlbof_forward.1} parent=1 // pred_fallthru
      _
    %39 = sfence
    %s41 = sld [smem:[#allocation2]]
    %s42 = sld [smem:[#allocation2 + $0x1]]
    %s43 = sld [smem:[#allocation2 + $0x2]]
    %s44 = sld [smem:[#allocation2 + $0x3]]
    %v45 = vld [vmem:[%s5] sm:$0x77]
    %v46 = vld [vmem:[%s5 + $0x8] sm:$0x77]
    %v47 = vld [vmem:[%s0] sm:$0xff]
    %v48 = vld [vmem:[%s0 + $0x8] sm:$0xff]
    %v49 = vld [vmem:[%s0 + $0x10] sm:$0xff]
    %v50 = vld [vmem:[%s0 + $0x18] sm:$0xff]
    %v51 = vld [vmem:[%s0 + $0x20] sm:$0xff]
    %v52 = vld [vmem:[%s0 + $0x28] sm:$0xff]
    %v53 = vld [vmem:[%s0 + $0x30] sm:$0xff]
    %v54 = vld [vmem:[%s0 + $0x38] sm:$0xff]
    %v55 = vld [vmem:[%s0 + $0x40] sm:$0xff]
    %v56 = vld [vmem:[%s0 + $0x48] sm:$0x77]
    %v57 = vld [vmem:[%s0 + $0x50] sm:$0x77]
    %v58 = vld [vmem:[%s0 + $0x58] sm:$0x77]
    %v59 = vld [vmem:[%s1] sm:$0xf]
    %v60 = vld [vmem:[%s1 + $0x4] sm:$0xf]
    %v61 = vld [vmem:[%s1 + $0x8] sm:$0xf]
    %v62 = vld [vmem:[%s1 + $0xc] sm:$0xf]
    %v63 = vld [vmem:[%s1 + $0x10] sm:$0xf]
    %v64 = vld [vmem:[%s1 + $0x14] sm:$0xf]
    %v65 = vld [vmem:[%s1 + $0x18] sm:$0xf]
    %v66 = vld [vmem:[%s1 + $0x1c] sm:$0xf]
    %v67 = vld [vmem:[%s1 + $0x20] sm:$0xf]
    %v68 = vld [vmem:[%s1 + $0x24] sm:$0xf]
    %v69 = vld [vmem:[%s1 + $0x28] sm:$0xf]
    %v70 = vld [vmem:[%s1 + $0x2c] sm:$0xf]
    %v71 = vld [vmem:[%s1 + $0x30] sm:$0xf]
    %v72 = vld [vmem:[%s1 + $0x34] sm:$0xf]
    %v73 = vld [vmem:[%s1 + $0x38] sm:$0xf]
    %v74 = vld [vmem:[%s1 + $0x3c] sm:$0xf]
    %v75 = vld [vmem:[%s1 + $0x40] sm:$0xf]
    %v76 = vld [vmem:[%s1 + $0x44] sm:$0xf]
    %v77 = vld [vmem:[%s1 + $0x48] sm:$0xf]
    %v78 = vld [vmem:[%s1 + $0x4c] sm:$0xf]
    %v79 = vld [vmem:[%s1 + $0x50] sm:$0xf]
    %v80 = vld [vmem:[%s1 + $0x54] sm:$0xf]
    %v81 = vld [vmem:[%s1 + $0x58] sm:$0xf]
    %v82 = vld [vmem:[%s1 + $0x5c] sm:$0xf]
    %v83 = vld [vmem:[%s1 + $0x60] sm:$0xf]
    %v84 = vld [vmem:[%s1 + $0x64] sm:$0xf]
    %v85 = vld [vmem:[%s1 + $0x68] sm:$0xf]
    %v86 = vld [vmem:[%s1 + $0x6c] sm:$0xf]
    %v87 = vld [vmem:[%s1 + $0x70] sm:$0xf]
    %v88 = vld [vmem:[%s1 + $0x74] sm:$0xf]
    %v89 = vld [vmem:[%s1 + $0x78] sm:$0xf]
    %v90 = vld [vmem:[%s1 + $0x7c] sm:$0xf]
    %v91 = vld [vmem:[%s1 + $0x80] sm:$0xf]
    %v92 = vld [vmem:[%s1 + $0x84] sm:$0xf]
    %v93 = vld [vmem:[%s1 + $0x88] sm:$0xf]
    %v94 = vld [vmem:[%s1 + $0x8c] sm:$0xf]
    %v95 = vld [vmem:[%s1 + $0x90] sm:$0xf]
    %v96 = vld [vmem:[%s1 + $0x94] sm:$0xf]
    %v97 = vld [vmem:[%s1 + $0x98] sm:$0xf]
    %v98 = vld [vmem:[%s1 + $0x9c] sm:$0xf]
    %v99 = vld [vmem:[%s1 + $0xa0] sm:$0xf]
    %v100 = vld [vmem:[%s1 + $0xa4] sm:$0xf]
    %v101 = vld [vmem:[%s1 + $0xa8] sm:$0xf]
    %v102 = vld [vmem:[%s1 + $0xac] sm:$0xf]
    %v103 = vld [vmem:[%s1 + $0xb0] sm:$0xf]
    %v104 = vld [vmem:[%s1 + $0xb4] sm:$0xf]
    %v105 = vld [vmem:[%s1 + $0xb8] sm:$0xf]
    %v106 = vld [vmem:[%s1 + $0xbc] sm:$0xf]
    %v107 = vld [vmem:[%s1 + $0xc0] sm:$0xf]
    %v108 = vld [vmem:[%s1 + $0xc4] sm:$0xf]
    %v109 = vld [vmem:[%s1 + $0xc8] sm:$0xf]
    %v110 = vld [vmem:[%s1 + $0xcc] sm:$0xf]
    %v111 = vld [vmem:[%s1 + $0xd0] sm:$0xf]
    %v112 = vld [vmem:[%s1 + $0xd4] sm:$0xf]
    %v113 = vld [vmem:[%s1 + $0xd8] sm:$0xf]
    %v114 = vld [vmem:[%s1 + $0xdc] sm:$0xf]
    %v115 = vld [vmem:[%s1 + $0xe0] sm:$0xf]
    %v116 = vld [vmem:[%s1 + $0xe4] sm:$0xf]
    %v117 = vld [vmem:[%s1 + $0xe8] sm:$0xf]
    %v118 = vld [vmem:[%s1 + $0xec] sm:$0xf]
    %v119 = vld [vmem:[%s1 + $0xf0] sm:$0xf]
    %v120 = vld [vmem:[%s1 + $0xf4] sm:$0xf]
    %v121 = vld [vmem:[%s1 + $0xf8] sm:$0xf]
    %v122 = vld [vmem:[%s1 + $0xfc] sm:$0xf]
    %v123 = vld [vmem:[%s1 + $0x100] sm:$0xf]
    %v124 = vld [vmem:[%s1 + $0x104] sm:$0xf]
    %v125 = vld [vmem:[%s1 + $0x108] sm:$0xf]
    %v126 = vld [vmem:[%s1 + $0x10c] sm:$0xf]
    %v127 = vld [vmem:[%s1 + $0x110] sm:$0xf]
    %v128 = vld [vmem:[%s1 + $0x114] sm:$0xf]
    %v129 = vld [vmem:[%s1 + $0x118] sm:$0xf]
    %v130 = vld [vmem:[%s1 + $0x11c] sm:$0xf]
    %v131 = vld [vmem:[%s1 + $0x120] sm:$0xf]
    %v132 = vld [vmem:[%s1 + $0x124] sm:$0xf]
    %v133 = vld [vmem:[%s1 + $0x128] sm:$0xf]
    %v134 = vld [vmem:[%s1 + $0x12c] sm:$0xf]
    %v135 = vld [vmem:[%s1 + $0x130] sm:$0xf]
    %v136 = vld [vmem:[%s1 + $0x134] sm:$0xf]
    %v137 = vld [vmem:[%s1 + $0x138] sm:$0xf]
    %v138 = vld [vmem:[%s1 + $0x13c] sm:$0xf]
    %v139 = vld [vmem:[%s1 + $0x140] sm:$0xf]
    %v140 = vld [vmem:[%s1 + $0x144] sm:$0xf]
    %v141 = vld [vmem:[%s1 + $0x148] sm:$0xf]
    %v142 = vld [vmem:[%s1 + $0x14c] sm:$0xf]
    %v143 = vld [vmem:[%s1 + $0x150] sm:$0xf]
    %v144 = vld [vmem:[%s1 + $0x154] sm:$0xf]
    %v145 = vld [vmem:[%s1 + $0x158] sm:$0xf]
    %v146 = vld [vmem:[%s1 + $0x15c] sm:$0xf]
    %v147 = vld [vmem:[%s1 + $0x160] sm:$0xf]
    %v148 = vld [vmem:[%s1 + $0x164] sm:$0xf]
    %v149 = vld [vmem:[%s1 + $0x168] sm:$0xf]
    %v150 = vld [vmem:[%s1 + $0x16c] sm:$0xf]
    %v151 = vld [vmem:[%s1 + $0x170] sm:$0xf]
    %v152 = vld [vmem:[%s1 + $0x174] sm:$0xf]
    %v153 = vld [vmem:[%s1 + $0x178] sm:$0xf]
    %v154 = vld [vmem:[%s1 + $0x17c] sm:$0xf]
    %v167 = vunpack.c.l.b16 %v47
    %v168 = vunpack.c.h.b16 %v47
    %v169 = vunpack.c.l.b16 %v48
    %v170 = vunpack.c.h.b16 %v48
    %v171 = vunpack.c.l.b16 %v49
    %v172 = vunpack.c.h.b16 %v49
    %v173 = vunpack.c.l.b16 %v50
    %v174 = vunpack.c.h.b16 %v50
    %v175 = vunpack.c.l.b16 %v51
    %v176 = vunpack.c.h.b16 %v51
    %v177 = vunpack.c.l.b16 %v52
    %v178 = vunpack.c.h.b16 %v52
    %v179 = vunpack.c.l.b16 %v53
    %v180 = vunpack.c.h.b16 %v53
    %v181 = vunpack.c.l.b16 %v54
    %v182 = vunpack.c.h.b16 %v54
    %v183 = vunpack.c.l.b16 %v55
    %v184 = vunpack.c.h.b16 %v55
    %v185 = vunpack.c.l.b16 %v56
    %v186 = vunpack.c.h.b16 %v56
    %v187 = vunpack.c.l.b16 %v57
    %v188 = vunpack.c.h.b16 %v57
    %v189 = vunpack.c.l.b16 %v58
    %v190 = vunpack.c.h.b16 %v58
    %v191 = vpack.c.b16 %v173, %v167
    %v192 = vpack.c.b16 %v174, %v168
    %v193 = vpack.c.b16 %v175, %v169
    %v194 = vpack.c.b16 %v176, %v170
    %v195 = vpack.c.b16 %v177, %v171
    %v196 = vpack.c.b16 %v178, %v172
    %v197 = vpack.c.b16 %v185, %v179
    %v198 = vpack.c.b16 %v186, %v180
    %v199 = vpack.c.b16 %v187, %v181
    %v200 = vpack.c.b16 %v188, %v182
    %v201 = vpack.c.b16 %v189, %v183
    %v202 = vpack.c.b16 %v190, %v184
    %v311 = vunpack.c.l.b16 %v59
    %v312 = vunpack.c.l.b16 %v60
    %v313 = vunpack.c.l.b16 %v61
    %v314 = vunpack.c.l.b16 %v62
    %v315 = vunpack.c.l.b16 %v63
    %v316 = vunpack.c.l.b16 %v64
    %v317 = vunpack.c.l.b16 %v65
    %v318 = vunpack.c.l.b16 %v66
    %v319 = vunpack.c.l.b16 %v67
    %v320 = vunpack.c.l.b16 %v68
    %v321 = vunpack.c.l.b16 %v69
    %v322 = vunpack.c.l.b16 %v70
    %v323 = vunpack.c.l.b16 %v71
    %v324 = vunpack.c.l.b16 %v72
    %v325 = vunpack.c.l.b16 %v73
    %v326 = vunpack.c.l.b16 %v74
    %v327 = vunpack.c.l.b16 %v75
    %v328 = vunpack.c.l.b16 %v76
    %v329 = vunpack.c.l.b16 %v77
    %v330 = vunpack.c.l.b16 %v78
    %v331 = vunpack.c.l.b16 %v79
    %v332 = vunpack.c.l.b16 %v80
    %v333 = vunpack.c.l.b16 %v81
    %v334 = vunpack.c.l.b16 %v82
    %v335 = vunpack.c.l.b16 %v83
    %v336 = vunpack.c.l.b16 %v84
    %v337 = vunpack.c.l.b16 %v85
    %v338 = vunpack.c.l.b16 %v86
    %v339 = vunpack.c.l.b16 %v87
    %v340 = vunpack.c.l.b16 %v88
    %v341 = vunpack.c.l.b16 %v89
    %v342 = vunpack.c.l.b16 %v90
    %v343 = vunpack.c.l.b16 %v91
    %v344 = vunpack.c.l.b16 %v92
    %v345 = vunpack.c.l.b16 %v93
    %v346 = vunpack.c.l.b16 %v94
    %v347 = vunpack.c.l.b16 %v95
    %v348 = vunpack.c.l.b16 %v96
    %v349 = vunpack.c.l.b16 %v97
    %v350 = vunpack.c.l.b16 %v98
    %v351 = vunpack.c.l.b16 %v99
    %v352 = vunpack.c.l.b16 %v100
    %v353 = vunpack.c.l.b16 %v101
    %v354 = vunpack.c.l.b16 %v102
    %v355 = vunpack.c.l.b16 %v103
    %v356 = vunpack.c.l.b16 %v104
    %v357 = vunpack.c.l.b16 %v105
    %v358 = vunpack.c.l.b16 %v106
    %v359 = vunpack.c.l.b16 %v107
    %v360 = vunpack.c.l.b16 %v108
    %v361 = vunpack.c.l.b16 %v109
    %v362 = vunpack.c.l.b16 %v110
    %v363 = vunpack.c.l.b16 %v111
    %v364 = vunpack.c.l.b16 %v112
    %v365 = vunpack.c.l.b16 %v113
    %v366 = vunpack.c.l.b16 %v114
    %v367 = vunpack.c.l.b16 %v115
    %v368 = vunpack.c.l.b16 %v116
    %v369 = vunpack.c.l.b16 %v117
    %v370 = vunpack.c.l.b16 %v118
    %v371 = vunpack.c.l.b16 %v119
    %v372 = vunpack.c.l.b16 %v120
    %v373 = vunpack.c.l.b16 %v121
    %v374 = vunpack.c.l.b16 %v122
    %v375 = vunpack.c.l.b16 %v123
    %v376 = vunpack.c.l.b16 %v124
    %v377 = vunpack.c.l.b16 %v125
    %v378 = vunpack.c.l.b16 %v126
    %v379 = vunpack.c.l.b16 %v127
    %v380 = vunpack.c.l.b16 %v128
    %v381 = vunpack.c.l.b16 %v129
    %v382 = vunpack.c.l.b16 %v130
    %v383 = vunpack.c.l.b16 %v131
    %v384 = vunpack.c.l.b16 %v132
    %v385 = vunpack.c.l.b16 %v133
    %v386 = vunpack.c.l.b16 %v134
    %v387 = vunpack.c.l.b16 %v135
    %v388 = vunpack.c.l.b16 %v136
    %v389 = vunpack.c.l.b16 %v137
    %v390 = vunpack.c.l.b16 %v138
    %v391 = vunpack.c.l.b16 %v139
    %v392 = vunpack.c.l.b16 %v140
    %v393 = vunpack.c.l.b16 %v141
    %v394 = vunpack.c.l.b16 %v142
    %v395 = vunpack.c.l.b16 %v143
    %v396 = vunpack.c.l.b16 %v144
    %v397 = vunpack.c.l.b16 %v145
    %v398 = vunpack.c.l.b16 %v146
    %v399 = vunpack.c.l.b16 %v147
    %v400 = vunpack.c.l.b16 %v148
    %v401 = vunpack.c.l.b16 %v149
    %v402 = vunpack.c.l.b16 %v150
    %v403 = vunpack.c.l.b16 %v151
    %v404 = vunpack.c.l.b16 %v152
    %v405 = vunpack.c.l.b16 %v153
    %v406 = vunpack.c.l.b16 %v154
    %v407 = vpack.c.b16 %v312, %v311
    %v408 = vpack.c.b16 %v314, %v313
    %v409 = vpack.c.b16 %v316, %v315
    %v410 = vpack.c.b16 %v318, %v317
    %v411 = vpack.c.b16 %v320, %v319
    %v412 = vpack.c.b16 %v322, %v321
    %v413 = vpack.c.b16 %v324, %v323
    %v414 = vpack.c.b16 %v326, %v325
    %v415 = vpack.c.b16 %v328, %v327
    %v416 = vpack.c.b16 %v330, %v329
    %v417 = vpack.c.b16 %v332, %v331
    %v418 = vpack.c.b16 %v334, %v333
    %v419 = vpack.c.b16 %v336, %v335
    %v420 = vpack.c.b16 %v338, %v337
    %v421 = vpack.c.b16 %v340, %v339
    %v422 = vpack.c.b16 %v342, %v341
    %v423 = vpack.c.b16 %v344, %v343
    %v424 = vpack.c.b16 %v346, %v345
    %v425 = vpack.c.b16 %v348, %v347
    %v426 = vpack.c.b16 %v350, %v349
    %v427 = vpack.c.b16 %v352, %v351
    %v428 = vpack.c.b16 %v354, %v353
    %v429 = vpack.c.b16 %v356, %v355
    %v430 = vpack.c.b16 %v358, %v357
    %v431 = vpack.c.b16 %v360, %v359
    %v432 = vpack.c.b16 %v362, %v361
    %v433 = vpack.c.b16 %v364, %v363
    %v434 = vpack.c.b16 %v366, %v365
    %v435 = vpack.c.b16 %v368, %v367
    %v436 = vpack.c.b16 %v370, %v369
    %v437 = vpack.c.b16 %v372, %v371
    %v438 = vpack.c.b16 %v374, %v373
    %v439 = vpack.c.b16 %v376, %v375
    %v440 = vpack.c.b16 %v378, %v377
    %v441 = vpack.c.b16 %v380, %v379
    %v442 = vpack.c.b16 %v382, %v381
    %v443 = vpack.c.b16 %v384, %v383
    %v444 = vpack.c.b16 %v386, %v385
    %v445 = vpack.c.b16 %v388, %v387
    %v446 = vpack.c.b16 %v390, %v389
    %v447 = vpack.c.b16 %v392, %v391
    %v448 = vpack.c.b16 %v394, %v393
    %v449 = vpack.c.b16 %v396, %v395
    %v450 = vpack.c.b16 %v398, %v397
    %v451 = vpack.c.b16 %v400, %v399
    %v452 = vpack.c.b16 %v402, %v401
    %v453 = vpack.c.b16 %v404, %v403
    %v454 = vpack.c.b16 %v406, %v405
    %503 = vmatprep.subr.bf16.mxu0 0
    %504 = vmatpush1.bf16.msra.mxu0 %v407
    %505 = vmatprep.subr.bf16.mxu0 0
    %506 = vmatpush1.bf16.msra.mxu0 %v408
    %507 = vmatprep.subr.bf16.mxu0 0
    %508 = vmatpush1.bf16.msra.mxu0 %v409
    %509 = vmatprep.subr.bf16.mxu0 0
    %510 = vmatpush1.bf16.msra.mxu0 %v410
    %511 = vmatprep.subr.bf16.mxu0 0
    %512 = vmatpush1.bf16.msra.mxu0 %v411
    %513 = vmatprep.subr.bf16.mxu0 0
    %514 = vmatpush1.bf16.msra.mxu0 %v412
    %515 = vmatprep.subr.bf16.mxu0 0
    %516 = vmatpush1.bf16.msra.mxu0 %v413
    %517 = vmatprep.subr.bf16.mxu0 0
    %518 = vmatpush1.bf16.msra.mxu0 %v414
    %519 = vmatprep.subr.bf16.mxu0 0
    %520 = vmatpush1.bf16.msra.mxu0 %v415
    %521 = vmatprep.subr.bf16.mxu0 0
    %522 = vmatpush1.bf16.msra.mxu0 %v416
    %523 = vmatprep.subr.bf16.mxu0 0
    %524 = vmatpush1.bf16.msra.mxu0 %v417
    %525 = vmatprep.subr.bf16.mxu0 0
    %526 = vmatpush1.bf16.msra.mxu0 %v418
    %527 = vmatprep.subr.bf16.mxu0 0
    %528 = vmatpush1.bf16.msra.mxu0 %v419
    %529 = vmatprep.subr.bf16.mxu0 0
    %530 = vmatpush1.bf16.msra.mxu0 %v420
    %531 = vmatprep.subr.bf16.mxu0 0
    %532 = vmatpush1.bf16.msra.mxu0 %v421
    %533 = vmatprep.subr.bf16.mxu0 0
    %534 = vmatpush1.bf16.msra.mxu0 %v422
    %535 = vmatprep.mubr.bf16.mxu0 %v192
    %536 = vmatmul.mubr.bf16.gmra.mrb[0].mxu0 %v191
    %v537 = vpop.f32.mrb[0].mxu0
    %v538 = vadd.f32 0.0, %v537
    %v539 = vpop.f32.mrb[0].mxu0
    %v540 = vpop.f32.mrb[0].mxu0
    %v541 = vadd.f32 0.0, %v540
    %v542 = vpop.f32.mrb[0].mxu0
    %543 = vmatprep.mubr.bf16.mxu0 %v198
    %544 = vmatmul.mubr.bf16.gmra.mrb[0].mxu0 %v197
    %v545 = vpop.f32.mrb[0].mxu0
    %v546 = vadd.f32 0.0, %v545
    %v547 = vpop.f32.mrb[0].mxu0
    %v548 = vpop.f32.mrb[0].mxu0
    %v549 = vadd.f32 0.0, %v548
    %v550 = vpop.f32.mrb[0].mxu0
    %551 = vdwg.mxu0
    %552 = vmatprep.subr.bf16.mxu0 0
    %553 = vmatpush1.bf16.msra.mxu0 %v423
    %554 = vmatprep.subr.bf16.mxu0 0
    %555 = vmatpush1.bf16.msra.mxu0 %v424
    %556 = vmatprep.subr.bf16.mxu0 0
    %557 = vmatpush1.bf16.msra.mxu0 %v425
    %558 = vmatprep.subr.bf16.mxu0 0
    %559 = vmatpush1.bf16.msra.mxu0 %v426
    %560 = vmatprep.subr.bf16.mxu0 0
    %561 = vmatpush1.bf16.msra.mxu0 %v427
    %562 = vmatprep.subr.bf16.mxu0 0
    %563 = vmatpush1.bf16.msra.mxu0 %v428
    %564 = vmatprep.subr.bf16.mxu0 0
    %565 = vmatpush1.bf16.msra.mxu0 %v429
    %566 = vmatprep.subr.bf16.mxu0 0
    %567 = vmatpush1.bf16.msra.mxu0 %v430
    %568 = vmatprep.subr.bf16.mxu0 0
    %569 = vmatpush1.bf16.msra.mxu0 %v431
    %570 = vmatprep.subr.bf16.mxu0 0
    %571 = vmatpush1.bf16.msra.mxu0 %v432
    %572 = vmatprep.subr.bf16.mxu0 0
    %573 = vmatpush1.bf16.msra.mxu0 %v433
    %574 = vmatprep.subr.bf16.mxu0 0
    %575 = vmatpush1.bf16.msra.mxu0 %v434
    %576 = vmatprep.subr.bf16.mxu0 0
    %577 = vmatpush1.bf16.msra.mxu0 %v435
    %578 = vmatprep.subr.bf16.mxu0 0
    %579 = vmatpush1.bf16.msra.mxu0 %v436
    %580 = vmatprep.subr.bf16.mxu0 0
    %581 = vmatpush1.bf16.msra.mxu0 %v437
    %582 = vmatprep.subr.bf16.mxu0 0
    %583 = vmatpush1.bf16.msra.mxu0 %v438
    %584 = vmatprep.mubr.bf16.mxu0 %v194
    %585 = vmatmul.mubr.bf16.gmra.mrb[0].mxu0 %v193
    %v586 = vpop.f32.mrb[0].mxu0
    %v587 = vadd.f32 %v538, %v586
    %v588 = vpop.f32.mrb[0].mxu0
    %v589 = vpop.f32.mrb[0].mxu0
    %v590 = vadd.f32 %v541, %v589
    %v591 = vpop.f32.mrb[0].mxu0
    %592 = vmatprep.mubr.bf16.mxu0 %v200
    %593 = vmatmul.mubr.bf16.gmra.mrb[0].mxu0 %v199
    %v594 = vpop.f32.mrb[0].mxu0
    %v595 = vadd.f32 %v546, %v594
    %v596 = vpop.f32.mrb[0].mxu0
    %v597 = vpop.f32.mrb[0].mxu0
    %v598 = vadd.f32 %v549, %v597
    %v599 = vpop.f32.mrb[0].mxu0
    %600 = vdwg.mxu0
    %601 = vmatprep.subr.bf16.mxu0 0
    %602 = vmatpush1.bf16.msra.mxu0 %v439
    %603 = vmatprep.subr.bf16.mxu0 0
    %604 = vmatpush1.bf16.msra.mxu0 %v440
    %605 = vmatprep.subr.bf16.mxu0 0
    %606 = vmatpush1.bf16.msra.mxu0 %v441
    %607 = vmatprep.subr.bf16.mxu0 0
    %608 = vmatpush1.bf16.msra.mxu0 %v442
    %609 = vmatprep.subr.bf16.mxu0 0
    %610 = vmatpush1.bf16.msra.mxu0 %v443
    %611 = vmatprep.subr.bf16.mxu0 0
    %612 = vmatpush1.bf16.msra.mxu0 %v444
    %613 = vmatprep.subr.bf16.mxu0 0
    %614 = vmatpush1.bf16.msra.mxu0 %v445
    %615 = vmatprep.subr.bf16.mxu0 0
    %616 = vmatpush1.bf16.msra.mxu0 %v446
    %617 = vmatprep.subr.bf16.mxu0 0
    %618 = vmatpush1.bf16.msra.mxu0 %v447
    %619 = vmatprep.subr.bf16.mxu0 0
    %620 = vmatpush1.bf16.msra.mxu0 %v448
    %621 = vmatprep.subr.bf16.mxu0 0
    %622 = vmatpush1.bf16.msra.mxu0 %v449
    %623 = vmatprep.subr.bf16.mxu0 0
    %624 = vmatpush1.bf16.msra.mxu0 %v450
    %625 = vmatprep.subr.bf16.mxu0 0
    %626 = vmatpush1.bf16.msra.mxu0 %v451
    %627 = vmatprep.subr.bf16.mxu0 0
    %628 = vmatpush1.bf16.msra.mxu0 %v452
    %629 = vmatprep.subr.bf16.mxu0 0
    %630 = vmatpush1.bf16.msra.mxu0 %v453
    %631 = vmatprep.subr.bf16.mxu0 0
    %632 = vmatpush1.bf16.msra.mxu0 %v454
    %633 = vmatprep.mubr.bf16.mxu0 %v196
    %634 = vmatmul.mubr.bf16.gmra.mrb[0].mxu0 %v195
    %v635 = vpop.f32.mrb[0].mxu0
    %v636 = vadd.f32 %v587, %v635
    %v637 = vpop.f32.mrb[0].mxu0
    %v638 = vpop.f32.mrb[0].mxu0
    %v639 = vadd.f32 %v590, %v638
    %v640 = vpop.f32.mrb[0].mxu0
    %641 = vmatprep.mubr.bf16.mxu0 %v202
    %642 = vmatmul.mubr.bf16.gmra.mrb[0].mxu0 %v201
    %v643 = vpop.f32.mrb[0].mxu0
    %v644 = vadd.f32 %v595, %v643
    %v645 = vpop.f32.mrb[0].mxu0
    %v646 = vpop.f32.mrb[0].mxu0
    %v647 = vadd.f32 %v598, %v646
    %v648 = vpop.f32.mrb[0].mxu0
    %649 = vdwg.mxu0
    %v650 = vtanh.pop %v636
    %v651 = vtanh.pop %v639
    %v652 = vtanh.pop %v644
    %v653 = vtanh.pop %v647
    %v654 = vpack.c.bf16 %v651, %v650
    %v655 = vpack.c.bf16 %v653, %v652
    %v656 = vld [vmem:[%s2] sm:$0xf]
    %v657 = vld [vmem:[%s2 + $0x4] sm:$0xf]
    %v658 = vld [vmem:[%s2 + $0x8] sm:$0xf]
    %v659 = vld [vmem:[%s2 + $0xc] sm:$0xf]
    %v660 = vlaneseq
    %v661 = vshrl.u32 %v660, 7
    %v662 = vsub.s32 0, %v661
    %v663 = vrot.slane %v45, %v662
    %v668 = vunpack.c.l.b16 %v656
    %v669 = vunpack.c.l.b16 %v657
    %v670 = vunpack.c.l.b16 %v658
    %v671 = vunpack.c.l.b16 %v659
    %v672 = vpack.c.b16 %v669, %v668
    %v673 = vpack.c.b16 %v671, %v670
    %vm676 = vcmask 261120
    %v678 = vsel %vm676, %v654, 0
    %v681 = vsel %vm676, %v655, 0
    %683 = vmatprep.subr.bf16.mxu0 0
    %684 = vmatpush1.bf16.msra.mxu0 %v672
    %685 = vmatprep.subr.bf16.mxu0 0
    %686 = vmatpush1.bf16.msra.mxu0 %v673
    %687 = vmatprep.subr.bf16.mxu0 0
    %688 = vmatpush1.bf16.msra.mxu0 0
    %689 = vmatprep.subr.bf16.mxu0 0
    %690 = vmatpush1.bf16.msra.mxu0 0
    %691 = vmatprep.subr.bf16.mxu0 0
    %692 = vmatpush1.bf16.msra.mxu0 0
    %693 = vmatprep.subr.bf16.mxu0 0
    %694 = vmatpush1.bf16.msra.mxu0 0
    %695 = vmatprep.subr.bf16.mxu0 0
    %696 = vmatpush1.bf16.msra.mxu0 0
    %697 = vmatprep.subr.bf16.mxu0 0
    %698 = vmatpush1.bf16.msra.mxu0 0
    %699 = vmatprep.subr.bf16.mxu0 0
    %700 = vmatpush1.bf16.msra.mxu0 0
    %701 = vmatprep.subr.bf16.mxu0 0
    %702 = vmatpush1.bf16.msra.mxu0 0
    %703 = vmatprep.subr.bf16.mxu0 0
    %704 = vmatpush1.bf16.msra.mxu0 0
    %705 = vmatprep.subr.bf16.mxu0 0
    %706 = vmatpush1.bf16.msra.mxu0 0
    %707 = vmatprep.subr.bf16.mxu0 0
    %708 = vmatpush1.bf16.msra.mxu0 0
    %709 = vmatprep.subr.bf16.mxu0 0
    %710 = vmatpush1.bf16.msra.mxu0 0
    %711 = vmatprep.subr.bf16.mxu0 0
    %712 = vmatpush1.bf16.msra.mxu0 0
    %713 = vmatprep.subr.bf16.mxu0 0
    %714 = vmatpush1.bf16.msra.mxu0 0
    %715 = vmatprep.mubr.bf16.mxu0 0
    %716 = vmatmul.mubr.bf16.gmra.mrb[0].mxu0 %v678
    %v717 = vpop.f32.mrb[0].mxu0
    %v718 = vadd.f32 %v663, %v717
    %v719 = vpop.f32.mrb[0].mxu0
    %v720 = vpop.f32.mrb[0].mxu0
    %v721 = vadd.f32 %v663, %v720
    %v722 = vpop.f32.mrb[0].mxu0
    %723 = vmatprep.mubr.bf16.mxu0 0
    %724 = vmatmul.mubr.bf16.gmra.mrb[0].mxu0 %v681
    %v725 = vpop.f32.mrb[0].mxu0
    %v726 = vadd.f32 %v663, %v725
    %v727 = vpop.f32.mrb[0].mxu0
    %v728 = vpop.f32.mrb[0].mxu0
    %v729 = vadd.f32 %v663, %v728
    %v730 = vpop.f32.mrb[0].mxu0
    %731 = vdwg.mxu0
    %v732 = vstv %s41
    %v733 = vmul.f32 %v732, %v718
    %v734 = vmul.f32 %v732, %v721
    %v735 = vmul.f32 %v732, %v726
    %v736 = vmul.f32 %v732, %v729
    %v737 = vstv %s42
    %v738 = vadd.f32 %v733, %v737
    %v739 = vadd.f32 %v734, %v737
    %v740 = vadd.f32 %v735, %v737
    %v741 = vadd.f32 %v736, %v737
    %v742 = vtanh.pop %v738
    %v743 = vtanh.pop %v739
    %v744 = vtanh.pop %v740
    %v745 = vtanh.pop %v741
    %v746 = vadd.f32 %v742, 1.0
    %v747 = vadd.f32 %v743, 1.0
    %v748 = vadd.f32 %v744, 1.0
    %v749 = vadd.f32 %v745, 1.0
    %v750 = vmul.f32 %v746, 0.5
    %v751 = vmul.f32 %v747, 0.5
    %v752 = vmul.f32 %v748, 0.5
    %v753 = vmul.f32 %v749, 0.5
    %v754 = vsel %vm676, %v750, 0.0
    %755 = vadd.xlane.f32.xlu0 %v754
    %v756 = vpop.xlane.xlu0 %755
    %v757 = vsel %vm676, %v751, 0.0
    %758 = vadd.xlane.f32.xlu0 %v757
    %v759 = vpop.xlane.xlu0 %758
    %v760 = vsel %vm676, %v752, 0.0
    %761 = vadd.xlane.f32.xlu0 %v760
    %v762 = vpop.xlane.xlu0 %761
    %vm763 = vcmask 259072
    %v764 = vsel %vm763, %v753, 0.0
    %765 = vadd.xlane.f32.xlu0 %v764
    %v766 = vpop.xlane.xlu0 %765
    %v767 = vrcp.pop %v756
    %v768 = vrcp.pop %v759
    %v769 = vrcp.pop %v762
    %v770 = vrcp.pop %v766
    %v771 = vstv %s43
    %v772 = vmul.f32 %v771, %v767
    %v773 = vmul.f32 %v771, %v768
    %v774 = vmul.f32 %v771, %v769
    %v775 = vmul.f32 %v771, %v770
    %v776 = vmul.f32 %v750, %v772
    %v777 = vmul.f32 %v751, %v773
    %v778 = vmul.f32 %v752, %v774
    %v779 = vmul.f32 %v753, %v775
    %v784 = vcombine.high %v776, %v776
    %v786 = vunpack.c.l.s4 1966171168
    %v787 = vunpack.c.0.s8 %v786
    %v788 = vlaneseq
    %v789 = vshrl.u32 %v788, 7
    %v790 = vsub.s32 %v787, %v789
    %v791 = vrot.slane %v776, %v790
    %v793 = vunpack.c.l.s4 1966171168
    %v794 = vunpack.c.0.s8 %v793
    %v795 = vlaneseq
    %v796 = vshrl.u32 %v795, 7
    %v797 = vsub.s32 %v794, %v796
    %v798 = vrot.slane %v784, %v797
    %v799 = vcombine.high %v791, %v791
    %v800 = vcombine.high %v798, %v798
    %v802 = vunpack.c.l.s4 1966171168
    %v803 = vunpack.c.0.s8 %v802
    %v804 = vlaneseq
    %v805 = vshrl.u32 %v804, 7
    %v806 = vsub.s32 %v803, %v805
    %v807 = vrot.slane %v791, %v806
    %v809 = vunpack.c.l.s4 1966171168
    %v810 = vunpack.c.0.s8 %v809
    %v811 = vlaneseq
    %v812 = vshrl.u32 %v811, 7
    %v813 = vsub.s32 %v810, %v812
    %v814 = vrot.slane %v798, %v813
    %v816 = vunpack.c.l.s4 1966171168
    %v817 = vunpack.c.0.s8 %v816
    %v818 = vlaneseq
    %v819 = vshrl.u32 %v818, 7
    %v820 = vsub.s32 %v817, %v819
    %v821 = vrot.slane %v799, %v820
    %v823 = vunpack.c.l.s4 1966171168
    %v824 = vunpack.c.0.s8 %v823
    %v825 = vlaneseq
    %v826 = vshrl.u32 %v825, 7
    %v827 = vsub.s32 %v824, %v826
    %v828 = vrot.slane %v800, %v827
    %v829 = vcombine.high %v807, %v807
    %v830 = vcombine.high %v814, %v814
    %v831 = vcombine.high %v821, %v821
    %v832 = vcombine.high %v828, %v828
    %v833 = vcombine.high %v777, %v777
    %v835 = vunpack.c.l.s4 1966171168
    %v836 = vunpack.c.0.s8 %v835
    %v837 = vlaneseq
    %v838 = vshrl.u32 %v837, 7
    %v839 = vsub.s32 %v836, %v838
    %v840 = vrot.slane %v777, %v839
    %v842 = vunpack.c.l.s4 1966171168
    %v843 = vunpack.c.0.s8 %v842
    %v844 = vlaneseq
    %v845 = vshrl.u32 %v844, 7
    %v846 = vsub.s32 %v843, %v845
    %v847 = vrot.slane %v833, %v846
    %v848 = vcombine.high %v840, %v840
    %v849 = vcombine.high %v847, %v847
    %v851 = vunpack.c.l.s4 1966171168
    %v852 = vunpack.c.0.s8 %v851
    %v853 = vlaneseq
    %v854 = vshrl.u32 %v853, 7
    %v855 = vsub.s32 %v852, %v854
    %v856 = vrot.slane %v840, %v855
    %v858 = vunpack.c.l.s4 1966171168
    %v859 = vunpack.c.0.s8 %v858
    %v860 = vlaneseq
    %v861 = vshrl.u32 %v860, 7
    %v862 = vsub.s32 %v859, %v861
    %v863 = vrot.slane %v847, %v862
    %v865 = vunpack.c.l.s4 1966171168
    %v866 = vunpack.c.0.s8 %v865
    %v867 = vlaneseq
    %v868 = vshrl.u32 %v867, 7
    %v869 = vsub.s32 %v866, %v868
    %v870 = vrot.slane %v848, %v869
    %v872 = vunpack.c.l.s4 1966171168
    %v873 = vunpack.c.0.s8 %v872
    %v874 = vlaneseq
    %v875 = vshrl.u32 %v874, 7
    %v876 = vsub.s32 %v873, %v875
    %v877 = vrot.slane %v849, %v876
    %v878 = vcombine.high %v856, %v856
    %v879 = vcombine.high %v863, %v863
    %v880 = vcombine.high %v870, %v870
    %v881 = vcombine.high %v877, %v877
    %v882 = vcombine.high %v778, %v778
    %v884 = vunpack.c.l.s4 1966171168
    %v885 = vunpack.c.0.s8 %v884
    %v886 = vlaneseq
    %v887 = vshrl.u32 %v886, 7
    %v888 = vsub.s32 %v885, %v887
    %v889 = vrot.slane %v778, %v888
    %v891 = vunpack.c.l.s4 1966171168
    %v892 = vunpack.c.0.s8 %v891
    %v893 = vlaneseq
    %v894 = vshrl.u32 %v893, 7
    %v895 = vsub.s32 %v892, %v894
    %v896 = vrot.slane %v882, %v895
    %v897 = vcombine.high %v889, %v889
    %v898 = vcombine.high %v896, %v896
    %v900 = vunpack.c.l.s4 1966171168
    %v901 = vunpack.c.0.s8 %v900
    %v902 = vlaneseq
    %v903 = vshrl.u32 %v902, 7
    %v904 = vsub.s32 %v901, %v903
    %v905 = vrot.slane %v889, %v904
    %v907 = vunpack.c.l.s4 1966171168
    %v908 = vunpack.c.0.s8 %v907
    %v909 = vlaneseq
    %v910 = vshrl.u32 %v909, 7
    %v911 = vsub.s32 %v908, %v910
    %v912 = vrot.slane %v896, %v911
    %v914 = vunpack.c.l.s4 1966171168
    %v915 = vunpack.c.0.s8 %v914
    %v916 = vlaneseq
    %v917 = vshrl.u32 %v916, 7
    %v918 = vsub.s32 %v915, %v917
    %v919 = vrot.slane %v897, %v918
    %v921 = vunpack.c.l.s4 1966171168
    %v922 = vunpack.c.0.s8 %v921
    %v923 = vlaneseq
    %v924 = vshrl.u32 %v923, 7
    %v925 = vsub.s32 %v922, %v924
    %v926 = vrot.slane %v898, %v925
    %v927 = vcombine.high %v905, %v905
    %v928 = vcombine.high %v912, %v912
    %v929 = vcombine.high %v919, %v919
    %v930 = vcombine.high %v926, %v926
    %v931 = vcombine.high %v779, %v779
    %v933 = vunpack.c.l.s4 1966171168
    %v934 = vunpack.c.0.s8 %v933
    %v935 = vlaneseq
    %v936 = vshrl.u32 %v935, 7
    %v937 = vsub.s32 %v934, %v936
    %v938 = vrot.slane %v779, %v937
    %v940 = vunpack.c.l.s4 1966171168
    %v941 = vunpack.c.0.s8 %v940
    %v942 = vlaneseq
    %v943 = vshrl.u32 %v942, 7
    %v944 = vsub.s32 %v941, %v943
    %v945 = vrot.slane %v931, %v944
    %v946 = vcombine.high %v938, %v938
    %v947 = vcombine.high %v945, %v945
    %v949 = vunpack.c.l.s4 1966171168
    %v950 = vunpack.c.0.s8 %v949
    %v951 = vlaneseq
    %v952 = vshrl.u32 %v951, 7
    %v953 = vsub.s32 %v950, %v952
    %v954 = vrot.slane %v938, %v953
    %v956 = vunpack.c.l.s4 1966171168
    %v957 = vunpack.c.0.s8 %v956
    %v958 = vlaneseq
    %v959 = vshrl.u32 %v958, 7
    %v960 = vsub.s32 %v957, %v959
    %v961 = vrot.slane %v945, %v960
    %v963 = vunpack.c.l.s4 1966171168
    %v964 = vunpack.c.0.s8 %v963
    %v965 = vlaneseq
    %v966 = vshrl.u32 %v965, 7
    %v967 = vsub.s32 %v964, %v966
    %v968 = vrot.slane %v946, %v967
    %v970 = vunpack.c.l.s4 1966171168
    %v971 = vunpack.c.0.s8 %v970
    %v972 = vlaneseq
    %v973 = vshrl.u32 %v972, 7
    %v974 = vsub.s32 %v971, %v973
    %v975 = vrot.slane %v947, %v974
    %v976 = vcombine.high %v954, %v954
    %v977 = vcombine.high %v968, %v968
    %v978 = vcombine.low %v807, %v821
    %v979 = vcombine.low %v829, %v831
    %v981 = vunpack.c.l.s4 1966171168
    %v982 = vunpack.c.0.s8 %v981
    %v983 = vlaneseq
    %v984 = vshrl.u32 %v983, 7
    %v985 = vsub.s32 %v982, %v984
    %v986 = vrot.slane %v978, %v985
    %v988 = vunpack.c.l.s4 1966171168
    %v989 = vunpack.c.0.s8 %v988
    %v990 = vlaneseq
    %v991 = vshrl.u32 %v990, 7
    %v992 = vsub.s32 %v989, %v991
    %v993 = vrot.slane %v979, %v992
    %v995 = vunpack.c.l.s4 1966171168
    %v996 = vunpack.c.0.s8 %v995
    %v997 = vlaneseq
    %v998 = vshrl.u32 %v997, 7
    %v999 = vsub.s32 %v996, %v998
    %v1000 = vrot.slane %v814, %v999
    %v1001 = vcombine.low %v986, %v993
    %v1003 = vunpack.c.l.s4 1966171168
    %v1004 = vunpack.c.0.s8 %v1003
    %v1005 = vlaneseq
    %v1006 = vshrl.u32 %v1005, 7
    %v1007 = vsub.s32 %v1004, %v1006
    %v1008 = vrot.slane %v1001, %v1007
    %v1010 = vunpack.c.l.s4 1966171168
    %v1011 = vunpack.c.0.s8 %v1010
    %v1012 = vlaneseq
    %v1013 = vshrl.u32 %v1012, 7
    %v1014 = vsub.s32 %v1011, %v1013
    %v1015 = vrot.slane %v1000, %v1014
    %v1016 = vcombine.low %v1008, %v1015
    %v1017 = vcombine.low %v881, %v905
    %v1018 = vcombine.low %v919, %v927
    %v1020 = vunpack.c.l.s4 1966171168
    %v1021 = vunpack.c.0.s8 %v1020
    %v1022 = vlaneseq
    %v1023 = vshrl.u32 %v1022, 7
    %v1024 = vsub.s32 %v1021, %v1023
    %v1025 = vrot.slane %v1017, %v1024
    %v1027 = vunpack.c.l.s4 1966171168
    %v1028 = vunpack.c.0.s8 %v1027
    %v1029 = vlaneseq
    %v1030 = vshrl.u32 %v1029, 7
    %v1031 = vsub.s32 %v1028, %v1030
    %v1032 = vrot.slane %v1018, %v1031
    %v1034 = vunpack.c.l.s4 1966171168
    %v1035 = vunpack.c.0.s8 %v1034
    %v1036 = vlaneseq
    %v1037 = vshrl.u32 %v1036, 7
    %v1038 = vsub.s32 %v1035, %v1037
    %v1039 = vrot.slane %v929, %v1038
    %v1040 = vcombine.low %v1025, %v1032
    %v1042 = vunpack.c.l.s4 1966171168
    %v1043 = vunpack.c.0.s8 %v1042
    %v1044 = vlaneseq
    %v1045 = vshrl.u32 %v1044, 7
    %v1046 = vsub.s32 %v1043, %v1045
    %v1047 = vrot.slane %v1040, %v1046
    %v1049 = vunpack.c.l.s4 1966171168
    %v1050 = vunpack.c.0.s8 %v1049
    %v1051 = vlaneseq
    %v1052 = vshrl.u32 %v1051, 7
    %v1053 = vsub.s32 %v1050, %v1052
    %v1054 = vrot.slane %v1039, %v1053
    %v1055 = vcombine.low %v1047, %v1054
    %vm1058 = vcmask 258048
    %v1059 = vsel %vm1058, %v1016, 0.0
    %v1060 = vrot.slane %v1059, 4
    %v1061 = vadd.f32 %v1059, %v1060
    %v1062 = vrot.slane %v1061, 2
    %v1063 = vadd.f32 %v1061, %v1062
    %v1064 = vrot.slane %v1063, 1
    %v1065 = vadd.f32 %v1063, %v1064
    %v1066 = vsel %vm1058, %v1055, 0.0
    %v1067 = vrot.slane %v1066, 4
    %v1068 = vadd.f32 %v1066, %v1067
    %v1069 = vrot.slane %v1068, 2
    %v1070 = vadd.f32 %v1068, %v1069
    %v1071 = vrot.slane %v1070, 1
    %v1072 = vadd.f32 %v1070, %v1071
    %v1073 = vrcp.pop 5.0
    %v1074 = vmul.f32 %v1065, %v1073
    %v1075 = vmul.f32 %v1072, %v1073
    %v1076 = vcombine.low %v828, %v830
    %v1077 = vcombine.low %v832, %v856
    %v1079 = vunpack.c.l.s4 1966171168
    %v1080 = vunpack.c.0.s8 %v1079
    %v1081 = vlaneseq
    %v1082 = vshrl.u32 %v1081, 7
    %v1083 = vsub.s32 %v1080, %v1082
    %v1084 = vrot.slane %v1076, %v1083
    %v1086 = vunpack.c.l.s4 1966171168
    %v1087 = vunpack.c.0.s8 %v1086
    %v1088 = vlaneseq
    %v1089 = vshrl.u32 %v1088, 7
    %v1090 = vsub.s32 %v1087, %v1089
    %v1091 = vrot.slane %v1077, %v1090
    %v1093 = vunpack.c.l.s4 1966171168
    %v1094 = vunpack.c.0.s8 %v1093
    %v1095 = vlaneseq
    %v1096 = vshrl.u32 %v1095, 7
    %v1097 = vsub.s32 %v1094, %v1096
    %v1098 = vrot.slane %v870, %v1097
    %v1099 = vcombine.low %v1084, %v1091
    %v1101 = vunpack.c.l.s4 1966171168
    %v1102 = vunpack.c.0.s8 %v1101
    %v1103 = vlaneseq
    %v1104 = vshrl.u32 %v1103, 7
    %v1105 = vsub.s32 %v1102, %v1104
    %v1106 = vrot.slane %v1099, %v1105
    %v1108 = vunpack.c.l.s4 1966171168
    %v1109 = vunpack.c.0.s8 %v1108
    %v1110 = vlaneseq
    %v1111 = vshrl.u32 %v1110, 7
    %v1112 = vsub.s32 %v1109, %v1111
    %v1113 = vrot.slane %v1098, %v1112
    %v1114 = vcombine.low %v1106, %v1113
    %v1115 = vcombine.low %v912, %v926
    %v1116 = vcombine.low %v928, %v930
    %v1118 = vunpack.c.l.s4 1966171168
    %v1119 = vunpack.c.0.s8 %v1118
    %v1120 = vlaneseq
    %v1121 = vshrl.u32 %v1120, 7
    %v1122 = vsub.s32 %v1119, %v1121
    %v1123 = vrot.slane %v1115, %v1122
    %v1125 = vunpack.c.l.s4 1966171168
    %v1126 = vunpack.c.0.s8 %v1125
    %v1127 = vlaneseq
    %v1128 = vshrl.u32 %v1127, 7
    %v1129 = vsub.s32 %v1126, %v1128
    %v1130 = vrot.slane %v1116, %v1129
    %v1132 = vunpack.c.l.s4 1966171168
    %v1133 = vunpack.c.0.s8 %v1132
    %v1134 = vlaneseq
    %v1135 = vshrl.u32 %v1134, 7
    %v1136 = vsub.s32 %v1133, %v1135
    %v1137 = vrot.slane %v954, %v1136
    %v1138 = vcombine.low %v1123, %v1130
    %v1140 = vunpack.c.l.s4 1966171168
    %v1141 = vunpack.c.0.s8 %v1140
    %v1142 = vlaneseq
    %v1143 = vshrl.u32 %v1142, 7
    %v1144 = vsub.s32 %v1141, %v1143
    %v1145 = vrot.slane %v1138, %v1144
    %v1147 = vunpack.c.l.s4 1966171168
    %v1148 = vunpack.c.0.s8 %v1147
    %v1149 = vlaneseq
    %v1150 = vshrl.u32 %v1149, 7
    %v1151 = vsub.s32 %v1148, %v1150
    %v1152 = vrot.slane %v1137, %v1151
    %v1153 = vcombine.low %v1145, %v1152
    %v1156 = vsel %vm1058, %v1114, 0.0
    %v1157 = vrot.slane %v1156, 4
    %v1158 = vadd.f32 %v1156, %v1157
    %v1159 = vrot.slane %v1158, 2
    %v1160 = vadd.f32 %v1158, %v1159
    %v1161 = vrot.slane %v1160, 1
    %v1162 = vadd.f32 %v1160, %v1161
    %v1163 = vsel %vm1058, %v1153, 0.0
    %v1164 = vrot.slane %v1163, 4
    %v1165 = vadd.f32 %v1163, %v1164
    %v1166 = vrot.slane %v1165, 2
    %v1167 = vadd.f32 %v1165, %v1166
    %v1168 = vrot.slane %v1167, 1
    %v1169 = vadd.f32 %v1167, %v1168
    %v1170 = vmul.f32 %v1162, %v1073
    %v1171 = vmul.f32 %v1169, %v1073
    %v1172 = vcombine.low %v878, %v880
    %v1173 = vcombine.low %v863, %v877
    %v1175 = vunpack.c.l.s4 1966171168
    %v1176 = vunpack.c.0.s8 %v1175
    %v1177 = vlaneseq
    %v1178 = vshrl.u32 %v1177, 7
    %v1179 = vsub.s32 %v1176, %v1178
    %v1180 = vrot.slane %v1172, %v1179
    %v1182 = vunpack.c.l.s4 1966171168
    %v1183 = vunpack.c.0.s8 %v1182
    %v1184 = vlaneseq
    %v1185 = vshrl.u32 %v1184, 7
    %v1186 = vsub.s32 %v1183, %v1185
    %v1187 = vrot.slane %v1173, %v1186
    %v1189 = vunpack.c.l.s4 1966171168
    %v1190 = vunpack.c.0.s8 %v1189
    %v1191 = vlaneseq
    %v1192 = vshrl.u32 %v1191, 7
    %v1193 = vsub.s32 %v1190, %v1192
    %v1194 = vrot.slane %v879, %v1193
    %v1195 = vcombine.low %v1180, %v1187
    %v1197 = vunpack.c.l.s4 1966171168
    %v1198 = vunpack.c.0.s8 %v1197
    %v1199 = vlaneseq
    %v1200 = vshrl.u32 %v1199, 7
    %v1201 = vsub.s32 %v1198, %v1200
    %v1202 = vrot.slane %v1195, %v1201
    %v1204 = vunpack.c.l.s4 1966171168
    %v1205 = vunpack.c.0.s8 %v1204
    %v1206 = vlaneseq
    %v1207 = vshrl.u32 %v1206, 7
    %v1208 = vsub.s32 %v1205, %v1207
    %v1209 = vrot.slane %v1194, %v1208
    %v1210 = vcombine.low %v1202, %v1209
    %v1211 = vcombine.low %v968, %v976
    %v1212 = vcombine.low %v977, %v961
    %v1214 = vunpack.c.l.s4 1966171168
    %v1215 = vunpack.c.0.s8 %v1214
    %v1216 = vlaneseq
    %v1217 = vshrl.u32 %v1216, 7
    %v1218 = vsub.s32 %v1215, %v1217
    %v1219 = vrot.slane %v1211, %v1218
    %v1221 = vunpack.c.l.s4 1966171168
    %v1222 = vunpack.c.0.s8 %v1221
    %v1223 = vlaneseq
    %v1224 = vshrl.u32 %v1223, 7
    %v1225 = vsub.s32 %v1222, %v1224
    %v1226 = vrot.slane %v1212, %v1225
    %v1228 = vunpack.c.l.s4 1966171168
    %v1229 = vunpack.c.0.s8 %v1228
    %v1230 = vlaneseq
    %v1231 = vshrl.u32 %v1230, 7
    %v1232 = vsub.s32 %v1229, %v1231
    %v1233 = vrot.slane %v975, %v1232
    %v1234 = vcombine.low %v1219, %v1226
    %v1236 = vunpack.c.l.s4 1966171168
    %v1237 = vunpack.c.0.s8 %v1236
    %v1238 = vlaneseq
    %v1239 = vshrl.u32 %v1238, 7
    %v1240 = vsub.s32 %v1237, %v1239
    %v1241 = vrot.slane %v1234, %v1240
    %v1243 = vunpack.c.l.s4 1966171168
    %v1244 = vunpack.c.0.s8 %v1243
    %v1245 = vlaneseq
    %v1246 = vshrl.u32 %v1245, 7
    %v1247 = vsub.s32 %v1244, %v1246
    %v1248 = vrot.slane %v1233, %v1247
    %v1249 = vcombine.low %v1241, %v1248
    %v1252 = vsel %vm1058, %v1210, 0.0
    %v1253 = vrot.slane %v1252, 4
    %v1254 = vadd.f32 %v1252, %v1253
    %v1255 = vrot.slane %v1254, 2
    %v1256 = vadd.f32 %v1254, %v1255
    %v1257 = vrot.slane %v1256, 1
    %v1258 = vadd.f32 %v1256, %v1257
    %v1259 = vsel %vm1058, %v1249, 0.0
    %v1260 = vrot.slane %v1259, 4
    %v1261 = vadd.f32 %v1259, %v1260
    %v1262 = vrot.slane %v1261, 2
    %v1263 = vadd.f32 %v1261, %v1262
    %v1264 = vrot.slane %v1263, 1
    %v1265 = vadd.f32 %v1263, %v1264
    %v1266 = vmul.f32 %v1258, %v1073
    %v1267 = vmul.f32 %v1265, %v1073
    %vm1270 = vcmask 1041409
    %v1271 = vsel %vm1270, %v1075, %v1074
    %v1275 = vsel %vm1270, %v1171, %v1170
    %1276 = vrot.lane.b32.xlu0 %v1275, 32
    %v1277 = vpop.permute.xlu0 %1276
    %v1281 = vsel %vm1270, %v1267, %v1266
    %1282 = vrot.lane.b32.xlu0 %v1281, 64
    %v1283 = vpop.permute.xlu0 %1282
    %v1285 = vsel %vm676, %v1271, %v1277
    %vm1286 = vcmask 523264
    %v1287 = vsel %vm1286, %v1285, %v1283
    %v1288 = vstv %s44
    %v1289 = vmul.f32 %v1287, %v1288
    %v1290 = vpack.c.bf16 %v1289, %v1289
    %v1291 = vld [vmem:[%s3] sm:$0xff]
    %v1292 = vld [vmem:[%s3 + $0x8] sm:$0xff]
    %v1293 = vld [vmem:[%s3 + $0x10] sm:$0xff]
    %v1294 = vld [vmem:[%s3 + $0x18] sm:$0xff]
    %v1295 = vld [vmem:[%s3 + $0x20] sm:$0xff]
    %v1296 = vld [vmem:[%s3 + $0x28] sm:$0xff]
    %v1297 = vld [vmem:[%s3 + $0x30] sm:$0xff]
    %v1298 = vld [vmem:[%s3 + $0x38] sm:$0xff]
    %v1299 = vld [vmem:[%s3 + $0x40] sm:$0xff]
    %v1300 = vld [vmem:[%s3 + $0x48] sm:$0xff]
    %v1301 = vld [vmem:[%s3 + $0x50] sm:$0xff]
    %v1302 = vld [vmem:[%s3 + $0x58] sm:$0xff]
    %v1303 = vld [vmem:[%s3 + $0x60] sm:$0xff]
    %v1304 = vld [vmem:[%s3 + $0x68] sm:$0xff]
    %v1305 = vld [vmem:[%s3 + $0x70] sm:$0xff]
    %v1306 = vld [vmem:[%s3 + $0x78] sm:$0xff]
    %v1307 = vld [vmem:[%s3 + $0x80] sm:$0xff]
    %v1308 = vld [vmem:[%s3 + $0x88] sm:$0xff]
    %v1309 = vld [vmem:[%s3 + $0x90] sm:$0xff]
    %v1310 = vld [vmem:[%s3 + $0x98] sm:$0xff]
    %v1311 = vld [vmem:[%s3 + $0xa0] sm:$0xff]
    %v1312 = vld [vmem:[%s3 + $0xa8] sm:$0xff]
    %v1313 = vld [vmem:[%s3 + $0xb0] sm:$0xff]
    %v1314 = vld [vmem:[%s3 + $0xb8] sm:$0xff]
    %v1317 = vlaneseq
    %v1318 = vshrl.u32 %v1317, 7
    %v1319 = vsub.s32 1, %v1318
    %v1320 = vrot.slane %v45, %v1319
    %v1321 = vlaneseq
    %v1322 = vshrl.u32 %v1321, 7
    %v1323 = vsub.s32 5, %v1322
    %v1324 = vrot.slane %v45, %v1323
    %v1325 = vlaneseq
    %v1326 = vshrl.u32 %v1325, 7
    %v1327 = vsub.s32 1, %v1326
    %v1328 = vrot.slane %v46, %v1327
    %v1329 = vlaneseq
    %v1330 = vshrl.u32 %v1329, 7
    %v1331 = vsub.s32 5, %v1330
    %v1332 = vrot.slane %v46, %v1331
    %v1337 = vlaneseq
    %v1338 = vshrl.u32 %v1337, 7
    %v1339 = vsub.s32 1, %v1338
    %v1340 = vrot.slane %v1320, %v1339
    %v1341 = vlaneseq
    %v1342 = vshrl.u32 %v1341, 7
    %v1343 = vsub.s32 1, %v1342
    %v1344 = vrot.slane %v1324, %v1343
    %v1345 = vlaneseq
    %v1346 = vshrl.u32 %v1345, 7
    %v1347 = vsub.s32 1, %v1346
    %v1348 = vrot.slane %v1328, %v1347
    %v1349 = vlaneseq
    %v1350 = vshrl.u32 %v1349, 7
    %v1351 = vsub.s32 1, %v1350
    %v1352 = vrot.slane %v1332, %v1351
    %v1377 = vunpack.c.l.b16 %v1291
    %v1378 = vunpack.c.h.b16 %v1291
    %v1379 = vunpack.c.l.b16 %v1292
    %v1380 = vunpack.c.h.b16 %v1292
    %v1381 = vunpack.c.l.b16 %v1293
    %v1382 = vunpack.c.h.b16 %v1293
    %v1383 = vunpack.c.l.b16 %v1294
    %v1384 = vunpack.c.h.b16 %v1294
    %v1385 = vunpack.c.l.b16 %v1295
    %v1386 = vunpack.c.h.b16 %v1295
    %v1387 = vunpack.c.l.b16 %v1296
    %v1388 = vunpack.c.h.b16 %v1296
    %v1389 = vunpack.c.l.b16 %v1297
    %v1390 = vunpack.c.h.b16 %v1297
    %v1391 = vunpack.c.l.b16 %v1298
    %v1392 = vunpack.c.h.b16 %v1298
    %v1393 = vunpack.c.l.b16 %v1299
    %v1394 = vunpack.c.h.b16 %v1299
    %v1395 = vunpack.c.l.b16 %v1300
    %v1396 = vunpack.c.h.b16 %v1300
    %v1397 = vunpack.c.l.b16 %v1301
    %v1398 = vunpack.c.h.b16 %v1301
    %v1399 = vunpack.c.l.b16 %v1302
    %v1400 = vunpack.c.h.b16 %v1302
    %v1401 = vunpack.c.l.b16 %v1303
    %v1402 = vunpack.c.h.b16 %v1303
    %v1403 = vunpack.c.l.b16 %v1304
    %v1404 = vunpack.c.h.b16 %v1304
    %v1405 = vunpack.c.l.b16 %v1305
    %v1406 = vunpack.c.h.b16 %v1305
    %v1407 = vunpack.c.l.b16 %v1306
    %v1408 = vunpack.c.h.b16 %v1306
    %v1409 = vunpack.c.l.b16 %v1307
    %v1410 = vunpack.c.h.b16 %v1307
    %v1411 = vunpack.c.l.b16 %v1308
    %v1412 = vunpack.c.h.b16 %v1308
    %v1413 = vunpack.c.l.b16 %v1309
    %v1414 = vunpack.c.h.b16 %v1309
    %v1415 = vunpack.c.l.b16 %v1310
    %v1416 = vunpack.c.h.b16 %v1310
    %v1417 = vunpack.c.l.b16 %v1311
    %v1418 = vunpack.c.h.b16 %v1311
    %v1419 = vunpack.c.l.b16 %v1312
    %v1420 = vunpack.c.h.b16 %v1312
    %v1421 = vunpack.c.l.b16 %v1313
    %v1422 = vunpack.c.h.b16 %v1313
    %v1423 = vunpack.c.l.b16 %v1314
    %v1424 = vunpack.c.h.b16 %v1314
    %v1425 = vpack.c.b16 %v1381, %v1377
    %v1426 = vpack.c.b16 %v1382, %v1378
    %v1427 = vpack.c.b16 %v1383, %v1379
    %v1428 = vpack.c.b16 %v1384, %v1380
    %v1429 = vpack.c.b16 %v1389, %v1385
    %v1430 = vpack.c.b16 %v1390, %v1386
    %v1431 = vpack.c.b16 %v1391, %v1387
    %v1432 = vpack.c.b16 %v1392, %v1388
    %v1433 = vpack.c.b16 %v1397, %v1393
    %v1434 = vpack.c.b16 %v1398, %v1394
    %v1435 = vpack.c.b16 %v1399, %v1395
    %v1436 = vpack.c.b16 %v1400, %v1396
    %v1437 = vpack.c.b16 %v1405, %v1401
    %v1438 = vpack.c.b16 %v1406, %v1402
    %v1439 = vpack.c.b16 %v1407, %v1403
    %v1440 = vpack.c.b16 %v1408, %v1404
    %v1441 = vpack.c.b16 %v1413, %v1409
    %v1442 = vpack.c.b16 %v1414, %v1410
    %v1443 = vpack.c.b16 %v1415, %v1411
    %v1444 = vpack.c.b16 %v1416, %v1412
    %v1445 = vpack.c.b16 %v1421, %v1417
    %v1446 = vpack.c.b16 %v1422, %v1418
    %v1447 = vpack.c.b16 %v1423, %v1419
    %v1448 = vpack.c.b16 %v1424, %v1420
    %vm1473 = vcmask 785408
    %v1475 = vsel %vm1473, %v1290, 0
    %1477 = vmatprep.subr.bf16.mxu0 %v1426
    %1478 = vmatpush1.bf16.msra.mxu0 %v1425
    %1479 = vmatprep.subr.bf16.mxu0 %v1430
    %1480 = vmatpush1.bf16.msra.mxu0 %v1429
    %1481 = vmatprep.subr.bf16.mxu0 %v1434
    %1482 = vmatpush1.bf16.msra.mxu0 %v1433
    %1483 = vmatprep.subr.bf16.mxu0 %v1438
    %1484 = vmatpush1.bf16.msra.mxu0 %v1437
    %1485 = vmatprep.subr.bf16.mxu0 %v1442
    %1486 = vmatpush1.bf16.msra.mxu0 %v1441
    %1487 = vmatprep.subr.bf16.mxu0 %v1446
    %1488 = vmatpush1.bf16.msra.mxu0 %v1445
    %1489 = vmatprep.subr.bf16.mxu0 0
    %1490 = vmatpush1.bf16.msra.mxu0 0
    %1491 = vmatprep.subr.bf16.mxu0 0
    %1492 = vmatpush1.bf16.msra.mxu0 0
    %1493 = vmatprep.subr.bf16.mxu0 0
    %1494 = vmatpush1.bf16.msra.mxu0 0
    %1495 = vmatprep.subr.bf16.mxu0 0
    %1496 = vmatpush1.bf16.msra.mxu0 0
    %1497 = vmatprep.subr.bf16.mxu0 0
    %1498 = vmatpush1.bf16.msra.mxu0 0
    %1499 = vmatprep.subr.bf16.mxu0 0
    %1500 = vmatpush1.bf16.msra.mxu0 0
    %1501 = vmatprep.subr.bf16.mxu0 0
    %1502 = vmatpush1.bf16.msra.mxu0 0
    %1503 = vmatprep.subr.bf16.mxu0 0
    %1504 = vmatpush1.bf16.msra.mxu0 0
    %1505 = vmatprep.subr.bf16.mxu0 0
    %1506 = vmatpush1.bf16.msra.mxu0 0
    %1507 = vmatprep.subr.bf16.mxu0 0
    %1508 = vmatpush1.bf16.msra.mxu0 0
    %1509 = vmatprep.mubr.bf16.mxu0 0
    %1510 = vmatmul.mubr.bf16.gmra.mrb[0].mxu0 %v1475
    %v1511 = vpop.f32.mrb[0].mxu0
    %v1512 = vadd.f32 %v1340, %v1511
    %v1513 = vpop.f32.mrb[0].mxu0
    %v1514 = vadd.f32 %v1344, %v1513
    %v1515 = vpop.f32.mrb[0].mxu0
    %v1516 = vpop.f32.mrb[0].mxu0
    %1517 = vdwg.mxu0
    %1518 = vmatprep.subr.bf16.mxu0 %v1428
    %1519 = vmatpush1.bf16.msra.mxu0 %v1427
    %1520 = vmatprep.subr.bf16.mxu0 %v1432
    %1521 = vmatpush1.bf16.msra.mxu0 %v1431
    %1522 = vmatprep.subr.bf16.mxu0 %v1436
    %1523 = vmatpush1.bf16.msra.mxu0 %v1435
    %1524 = vmatprep.subr.bf16.mxu0 %v1440
    %1525 = vmatpush1.bf16.msra.mxu0 %v1439
    %1526 = vmatprep.subr.bf16.mxu0 %v1444
    %1527 = vmatpush1.bf16.msra.mxu0 %v1443
    %1528 = vmatprep.subr.bf16.mxu0 %v1448
    %1529 = vmatpush1.bf16.msra.mxu0 %v1447
    %1530 = vmatprep.subr.bf16.mxu0 0
    %1531 = vmatpush1.bf16.msra.mxu0 0
    %1532 = vmatprep.subr.bf16.mxu0 0
    %1533 = vmatpush1.bf16.msra.mxu0 0
    %1534 = vmatprep.subr.bf16.mxu0 0
    %1535 = vmatpush1.bf16.msra.mxu0 0
    %1536 = vmatprep.subr.bf16.mxu0 0
    %1537 = vmatpush1.bf16.msra.mxu0 0
    %1538 = vmatprep.subr.bf16.mxu0 0
    %1539 = vmatpush1.bf16.msra.mxu0 0
    %1540 = vmatprep.subr.bf16.mxu0 0
    %1541 = vmatpush1.bf16.msra.mxu0 0
    %1542 = vmatprep.subr.bf16.mxu0 0
    %1543 = vmatpush1.bf16.msra.mxu0 0
    %1544 = vmatprep.subr.bf16.mxu0 0
    %1545 = vmatpush1.bf16.msra.mxu0 0
    %1546 = vmatprep.subr.bf16.mxu0 0
    %1547 = vmatpush1.bf16.msra.mxu0 0
    %1548 = vmatprep.subr.bf16.mxu0 0
    %1549 = vmatpush1.bf16.msra.mxu0 0
    %1550 = vmatprep.mubr.bf16.mxu0 0
    %1551 = vmatmul.mubr.bf16.gmra.mrb[0].mxu0 %v1475
    %v1552 = vpop.f32.mrb[0].mxu0
    %v1553 = vadd.f32 %v1348, %v1552
    %v1554 = vpop.f32.mrb[0].mxu0
    %v1555 = vadd.f32 %v1352, %v1554
    %v1556 = vpop.f32.mrb[0].mxu0
    %v1557 = vpop.f32.mrb[0].mxu0
    %1558 = vdwg.mxu0
    %v1559 = vmax.f32 %v1512, 0.0
    %v1560 = vmax.f32 %v1514, 0.0
    %v1561 = vmax.f32 %v1553, 0.0
    %v1562 = vmax.f32 %v1555, 0.0
    %v1563 = vpack.c.bf16 %v1559, %v1559
    %v1564 = vpack.c.bf16 %v1560, %v1560
    %v1565 = vpack.c.bf16 %v1561, %v1561
    %v1566 = vpack.c.bf16 %v1562, %v1562
    %v1567 = vld [vmem:[%s4] sm:$0xf]
    %v1568 = vld [vmem:[%s4 + $0x4] sm:$0xf]
    %v1569 = vld [vmem:[%s4 + $0x8] sm:$0xf]
    %v1570 = vld [vmem:[%s4 + $0xc] sm:$0xf]
    %v1571 = vld [vmem:[%s4 + $0x10] sm:$0xf]
    %v1572 = vld [vmem:[%s4 + $0x14] sm:$0xf]
    %v1573 = vld [vmem:[%s4 + $0x18] sm:$0xf]
    %v1574 = vld [vmem:[%s4 + $0x1c] sm:$0xf]
    %v1575 = vld [vmem:[%s4 + $0x20] sm:$0xf]
    %v1576 = vld [vmem:[%s4 + $0x24] sm:$0xf]
    %v1577 = vld [vmem:[%s4 + $0x28] sm:$0xf]
    %v1578 = vld [vmem:[%s4 + $0x2c] sm:$0xf]
    %v1579 = vld [vmem:[%s4 + $0x30] sm:$0xf]
    %v1580 = vld [vmem:[%s4 + $0x34] sm:$0xf]
    %v1581 = vld [vmem:[%s4 + $0x38] sm:$0xf]
    %v1582 = vld [vmem:[%s4 + $0x3c] sm:$0xf]
    %v1583 = vld [vmem:[%s4 + $0x40] sm:$0xf]
    %v1584 = vld [vmem:[%s4 + $0x44] sm:$0xf]
    %v1585 = vld [vmem:[%s4 + $0x48] sm:$0xf]
    %v1586 = vld [vmem:[%s4 + $0x4c] sm:$0xf]
    %v1587 = vld [vmem:[%s4 + $0x50] sm:$0xf]
    %v1588 = vld [vmem:[%s4 + $0x54] sm:$0xf]
    %v1589 = vld [vmem:[%s4 + $0x58] sm:$0xf]
    %v1590 = vld [vmem:[%s4 + $0x5c] sm:$0xf]
    %v1591 = vld [vmem:[%s4 + $0x60] sm:$0xf]
    %v1592 = vld [vmem:[%s4 + $0x64] sm:$0xf]
    %v1593 = vld [vmem:[%s4 + $0x68] sm:$0xf]
    %v1594 = vld [vmem:[%s4 + $0x6c] sm:$0xf]
    %v1595 = vld [vmem:[%s4 + $0x70] sm:$0xf]
    %v1596 = vld [vmem:[%s4 + $0x74] sm:$0xf]
    %v1597 = vld [vmem:[%s4 + $0x78] sm:$0xf]
    %v1598 = vld [vmem:[%s4 + $0x7c] sm:$0xf]
    %v1599 = vld [vmem:[%s4 + $0x80] sm:$0xf]
    %v1600 = vld [vmem:[%s4 + $0x84] sm:$0xf]
    %v1601 = vld [vmem:[%s4 + $0x88] sm:$0xf]
    %v1602 = vld [vmem:[%s4 + $0x8c] sm:$0xf]
    %v1603 = vld [vmem:[%s4 + $0x90] sm:$0xf]
    %v1604 = vld [vmem:[%s4 + $0x94] sm:$0xf]
    %v1605 = vld [vmem:[%s4 + $0x98] sm:$0xf]
    %v1606 = vld [vmem:[%s4 + $0x9c] sm:$0xf]
    %v1607 = vld [vmem:[%s4 + $0xa0] sm:$0xf]
    %v1608 = vld [vmem:[%s4 + $0xa4] sm:$0xf]
    %v1609 = vld [vmem:[%s4 + $0xa8] sm:$0xf]
    %v1610 = vld [vmem:[%s4 + $0xac] sm:$0xf]
    %v1611 = vld [vmem:[%s4 + $0xb0] sm:$0xf]
    %v1612 = vld [vmem:[%s4 + $0xb4] sm:$0xf]
    %v1613 = vld [vmem:[%s4 + $0xb8] sm:$0xf]
    %v1614 = vld [vmem:[%s4 + $0xbc] sm:$0xf]
    %v1615 = vld [vmem:[%s4 + $0xc0] sm:$0xf]
    %v1616 = vld [vmem:[%s4 + $0xc4] sm:$0xf]
    %v1617 = vld [vmem:[%s4 + $0xc8] sm:$0xf]
    %v1618 = vld [vmem:[%s4 + $0xcc] sm:$0xf]
    %v1619 = vld [vmem:[%s4 + $0xd0] sm:$0xf]
    %v1620 = vld [vmem:[%s4 + $0xd4] sm:$0xf]
    %v1621 = vld [vmem:[%s4 + $0xd8] sm:$0xf]
    %v1622 = vld [vmem:[%s4 + $0xdc] sm:$0xf]
    %v1623 = vld [vmem:[%s4 + $0xe0] sm:$0xf]
    %v1624 = vld [vmem:[%s4 + $0xe4] sm:$0xf]
    %v1625 = vld [vmem:[%s4 + $0xe8] sm:$0xf]
    %v1626 = vld [vmem:[%s4 + $0xec] sm:$0xf]
    %v1627 = vld [vmem:[%s4 + $0xf0] sm:$0xf]
    %v1628 = vld [vmem:[%s4 + $0xf4] sm:$0xf]
    %v1629 = vld [vmem:[%s4 + $0xf8] sm:$0xf]
    %v1630 = vld [vmem:[%s4 + $0xfc] sm:$0xf]
    %v1631 = vlaneseq
    %v1632 = vshrl.u32 %v1631, 7
    %v1633 = vsub.s32 2, %v1632
    %v1634 = vrot.slane %v45, %v1633
    %v1699 = vunpack.c.l.b16 %v1567
    %v1700 = vunpack.c.l.b16 %v1568
    %v1701 = vunpack.c.l.b16 %v1569
    %v1702 = vunpack.c.l.b16 %v1570
    %v1703 = vunpack.c.l.b16 %v1571
    %v1704 = vunpack.c.l.b16 %v1572
    %v1705 = vunpack.c.l.b16 %v1573
    %v1706 = vunpack.c.l.b16 %v1574
    %v1707 = vunpack.c.l.b16 %v1575
    %v1708 = vunpack.c.l.b16 %v1576
    %v1709 = vunpack.c.l.b16 %v1577
    %v1710 = vunpack.c.l.b16 %v1578
    %v1711 = vunpack.c.l.b16 %v1579
    %v1712 = vunpack.c.l.b16 %v1580
    %v1713 = vunpack.c.l.b16 %v1581
    %v1714 = vunpack.c.l.b16 %v1582
    %v1715 = vunpack.c.l.b16 %v1583
    %v1716 = vunpack.c.l.b16 %v1584
    %v1717 = vunpack.c.l.b16 %v1585
    %v1718 = vunpack.c.l.b16 %v1586
    %v1719 = vunpack.c.l.b16 %v1587
    %v1720 = vunpack.c.l.b16 %v1588
    %v1721 = vunpack.c.l.b16 %v1589
    %v1722 = vunpack.c.l.b16 %v1590
    %v1723 = vunpack.c.l.b16 %v1591
    %v1724 = vunpack.c.l.b16 %v1592
    %v1725 = vunpack.c.l.b16 %v1593
    %v1726 = vunpack.c.l.b16 %v1594
    %v1727 = vunpack.c.l.b16 %v1595
    %v1728 = vunpack.c.l.b16 %v1596
    %v1729 = vunpack.c.l.b16 %v1597
    %v1730 = vunpack.c.l.b16 %v1598
    %v1731 = vunpack.c.l.b16 %v1599
    %v1732 = vunpack.c.l.b16 %v1600
    %v1733 = vunpack.c.l.b16 %v1601
    %v1734 = vunpack.c.l.b16 %v1602
    %v1735 = vunpack.c.l.b16 %v1603
    %v1736 = vunpack.c.l.b16 %v1604
    %v1737 = vunpack.c.l.b16 %v1605
    %v1738 = vunpack.c.l.b16 %v1606
    %v1739 = vunpack.c.l.b16 %v1607
    %v1740 = vunpack.c.l.b16 %v1608
    %v1741 = vunpack.c.l.b16 %v1609
    %v1742 = vunpack.c.l.b16 %v1610
    %v1743 = vunpack.c.l.b16 %v1611
    %v1744 = vunpack.c.l.b16 %v1612
    %v1745 = vunpack.c.l.b16 %v1613
    %v1746 = vunpack.c.l.b16 %v1614
    %v1747 = vunpack.c.l.b16 %v1615
    %v1748 = vunpack.c.l.b16 %v1616
    %v1749 = vunpack.c.l.b16 %v1617
    %v1750 = vunpack.c.l.b16 %v1618
    %v1751 = vunpack.c.l.b16 %v1619
    %v1752 = vunpack.c.l.b16 %v1620
    %v1753 = vunpack.c.l.b16 %v1621
    %v1754 = vunpack.c.l.b16 %v1622
    %v1755 = vunpack.c.l.b16 %v1623
    %v1756 = vunpack.c.l.b16 %v1624
    %v1757 = vunpack.c.l.b16 %v1625
    %v1758 = vunpack.c.l.b16 %v1626
    %v1759 = vunpack.c.l.b16 %v1627
    %v1760 = vunpack.c.l.b16 %v1628
    %v1761 = vunpack.c.l.b16 %v1629
    %v1762 = vunpack.c.l.b16 %v1630
    %v1763 = vpack.c.b16 %v1700, %v1699
    %v1764 = vpack.c.b16 %v1702, %v1701
    %v1765 = vpack.c.b16 %v1704, %v1703
    %v1766 = vpack.c.b16 %v1706, %v1705
    %v1767 = vpack.c.b16 %v1708, %v1707
    %v1768 = vpack.c.b16 %v1710, %v1709
    %v1769 = vpack.c.b16 %v1712, %v1711
    %v1770 = vpack.c.b16 %v1714, %v1713
    %v1771 = vpack.c.b16 %v1716, %v1715
    %v1772 = vpack.c.b16 %v1718, %v1717
    %v1773 = vpack.c.b16 %v1720, %v1719
    %v1774 = vpack.c.b16 %v1722, %v1721
    %v1775 = vpack.c.b16 %v1724, %v1723
    %v1776 = vpack.c.b16 %v1726, %v1725
    %v1777 = vpack.c.b16 %v1728, %v1727
    %v1778 = vpack.c.b16 %v1730, %v1729
    %v1779 = vpack.c.b16 %v1732, %v1731
    %v1780 = vpack.c.b16 %v1734, %v1733
    %v1781 = vpack.c.b16 %v1736, %v1735
    %v1782 = vpack.c.b16 %v1738, %v1737
    %v1783 = vpack.c.b16 %v1740, %v1739
    %v1784 = vpack.c.b16 %v1742, %v1741
    %v1785 = vpack.c.b16 %v1744, %v1743
    %v1786 = vpack.c.b16 %v1746, %v1745
    %v1787 = vpack.c.b16 %v1748, %v1747
    %v1788 = vpack.c.b16 %v1750, %v1749
    %v1789 = vpack.c.b16 %v1752, %v1751
    %v1790 = vpack.c.b16 %v1754, %v1753
    %v1791 = vpack.c.b16 %v1756, %v1755
    %v1792 = vpack.c.b16 %v1758, %v1757
    %v1793 = vpack.c.b16 %v1760, %v1759
    %v1794 = vpack.c.b16 %v1762, %v1761
    %1827 = vmatprep.subr.bf16.mxu0 0
    %1828 = vmatpush1.bf16.msra.mxu0 %v1763
    %1829 = vmatprep.subr.bf16.mxu0 0
    %1830 = vmatpush1.bf16.msra.mxu0 %v1764
    %1831 = vmatprep.subr.bf16.mxu0 0
    %1832 = vmatpush1.bf16.msra.mxu0 %v1765
    %1833 = vmatprep.subr.bf16.mxu0 0
    %1834 = vmatpush1.bf16.msra.mxu0 %v1766
    %1835 = vmatprep.subr.bf16.mxu0 0
    %1836 = vmatpush1.bf16.msra.mxu0 %v1767
    %1837 = vmatprep.subr.bf16.mxu0 0
    %1838 = vmatpush1.bf16.msra.mxu0 %v1768
    %1839 = vmatprep.subr.bf16.mxu0 0
    %1840 = vmatpush1.bf16.msra.mxu0 %v1769
    %1841 = vmatprep.subr.bf16.mxu0 0
    %1842 = vmatpush1.bf16.msra.mxu0 %v1770
    %1843 = vmatprep.subr.bf16.mxu0 0
    %1844 = vmatpush1.bf16.msra.mxu0 %v1771
    %1845 = vmatprep.subr.bf16.mxu0 0
    %1846 = vmatpush1.bf16.msra.mxu0 %v1772
    %1847 = vmatprep.subr.bf16.mxu0 0
    %1848 = vmatpush1.bf16.msra.mxu0 %v1773
    %1849 = vmatprep.subr.bf16.mxu0 0
    %1850 = vmatpush1.bf16.msra.mxu0 %v1774
    %1851 = vmatprep.subr.bf16.mxu0 0
    %1852 = vmatpush1.bf16.msra.mxu0 %v1775
    %1853 = vmatprep.subr.bf16.mxu0 0
    %1854 = vmatpush1.bf16.msra.mxu0 %v1776
    %1855 = vmatprep.subr.bf16.mxu0 0
    %1856 = vmatpush1.bf16.msra.mxu0 %v1777
    %1857 = vmatprep.subr.bf16.mxu0 0
    %1858 = vmatpush1.bf16.msra.mxu0 %v1778
    %1859 = vmatprep.mubr.bf16.mxu0 %v1564
    %1860 = vmatmul.mubr.bf16.gmra.mrb[0].mxu0 %v1563
    %v1861 = vpop.f32.mrb[0].mxu0
    %v1862 = vadd.f32 %v1634, %v1861
    %v1863 = vpop.f32.mrb[0].mxu0
    %v1864 = vpop.f32.mrb[0].mxu0
    %v1865 = vpop.f32.mrb[0].mxu0
    %1866 = vdwg.mxu0
    %1867 = vmatprep.subr.bf16.mxu0 0
    %1868 = vmatpush1.bf16.msra.mxu0 %v1779
    %1869 = vmatprep.subr.bf16.mxu0 0
    %1870 = vmatpush1.bf16.msra.mxu0 %v1780
    %1871 = vmatprep.subr.bf16.mxu0 0
    %1872 = vmatpush1.bf16.msra.mxu0 %v1781
    %1873 = vmatprep.subr.bf16.mxu0 0
    %1874 = vmatpush1.bf16.msra.mxu0 %v1782
    %1875 = vmatprep.subr.bf16.mxu0 0
    %1876 = vmatpush1.bf16.msra.mxu0 %v1783
    %1877 = vmatprep.subr.bf16.mxu0 0
    %1878 = vmatpush1.bf16.msra.mxu0 %v1784
    %1879 = vmatprep.subr.bf16.mxu0 0
    %1880 = vmatpush1.bf16.msra.mxu0 %v1785
    %1881 = vmatprep.subr.bf16.mxu0 0
    %1882 = vmatpush1.bf16.msra.mxu0 %v1786
    %1883 = vmatprep.subr.bf16.mxu0 0
    %1884 = vmatpush1.bf16.msra.mxu0 %v1787
    %1885 = vmatprep.subr.bf16.mxu0 0
    %1886 = vmatpush1.bf16.msra.mxu0 %v1788
    %1887 = vmatprep.subr.bf16.mxu0 0
    %1888 = vmatpush1.bf16.msra.mxu0 %v1789
    %1889 = vmatprep.subr.bf16.mxu0 0
    %1890 = vmatpush1.bf16.msra.mxu0 %v1790
    %1891 = vmatprep.subr.bf16.mxu0 0
    %1892 = vmatpush1.bf16.msra.mxu0 %v1791
    %1893 = vmatprep.subr.bf16.mxu0 0
    %1894 = vmatpush1.bf16.msra.mxu0 %v1792
    %1895 = vmatprep.subr.bf16.mxu0 0
    %1896 = vmatpush1.bf16.msra.mxu0 %v1793
    %1897 = vmatprep.subr.bf16.mxu0 0
    %1898 = vmatpush1.bf16.msra.mxu0 %v1794
    %1899 = vmatprep.mubr.bf16.mxu0 %v1566
    %1900 = vmatmul.mubr.bf16.gmra.mrb[0].mxu0 %v1565
    %v1901 = vpop.f32.mrb[0].mxu0
    %v1902 = vadd.f32 %v1862, %v1901
    %v1903 = vpop.f32.mrb[0].mxu0
    %v1904 = vpop.f32.mrb[0].mxu0
    %v1905 = vpop.f32.mrb[0].mxu0
    %1906 = vdwg.mxu0
    %1907 = vst [vmem:[#allocation5] sm:$0x3] %v1902
    // Predicated region
    $region34: #{mlbof_forward.1} parent=1 // pred_check
      _
    $region35: #{mlbof_forward.1} parent=1 // pred_check_branch
      %1909 = sbr.rel (0) target = $region37
    $region36: #{mlbof_forward.1} parent=1 // pred_region
      %s1911 = ssub.s32 32, 32
      %1912 = vsyncadd [#allocation3], %s1911
      %s1914 = sshll.u32 [#allocation5], 4
      %s1915 = int_to_ptr.vmem [resolvable:$true] %s1914
      %1917 = dma.vmem_to_hbm [thread:$0]  %s1915, 32, %s7, [#allocation3]
    $region37: #{mlbof_forward.1} parent=1 // pred_fallthru
      _
    // Predicated region
    $region38: #{mlbof_forward.1} parent=1 // pred_check
      _
    $region39: #{mlbof_forward.1} parent=1 // pred_check_branch
      %1919 = sbr.rel (0) target = $region41
    $region40: #{mlbof_forward.1} parent=1 // pred_region
      %1920 = dma.done [#allocation3], 32
    $region41: #{mlbof_forward.1} parent=1 // pred_fallthru
      _
    %1921 = vsyncpa [#allocation3], 1
    %1922 = vsyncpa [#allocation4], 1

</llo_original>
